<compile_context>
chip_gen: v7x
topology: tpu7x:2x2x1
jax: 0.10.0
libtpu: 0.0.40
codegen_flags: <defaults>
</compile_context>

<pallas_src>
import functools

import jax
import jax.numpy as jnp
import numpy as np
from jax import lax
from jax.experimental import pallas as pl
from jax.experimental.pallas import tpu as pltpu


def _ipow(x, p):
    """torch.pow for the exponents used here; integral p via square-and-multiply."""
    p = float(p)
    if p.is_integer() and p >= 1:
        n = int(p)
        result, base = None, x
        while n:
            if n & 1:
                result = base if result is None else result * base
            n >>= 1
            if n:
                base = base * base
        return result
    return jnp.power(x, p)


def _tal_kernel(ps_ref, pb_ref, anc_ref, gl_ref, gb_ref, mg_ref,
                tl_ref, tb_ref, sc_ref, fg_ref,
                *, topk, alpha, beta, eps):
    f32 = jnp.float32

    pd_b = pb_ref[...]                            # (4, A)  xyxy, coord-major
    anc = anc_ref[...]                            # (2, A)  coord-major
    gt_b = gb_ref[...]                            # (M, 4)  xyxy
    mask_gt = mg_ref[...].astype(f32)             # (M, 1)
    lab = gl_ref[...]                             # (M, 1)  int32

    C, A = ps_ref.shape
    M = gt_b.shape[0]
    NEG = jnp.finfo(f32).min

    # ---- bbox_scores[m, :] = pd_scores[gt_label[m], :] via one-hot MXU matmul ----
    # (negative labels wrap like torch advanced indexing; clip keeps one-hot valid)
    lab_wrap = jnp.where(lab < 0, lab + C, lab)
    lab_g = jnp.clip(lab_wrap, 0, C - 1)                               # (M, 1)
    c_iota = lax.broadcasted_iota(jnp.int32, (1, C), 1)
    onehot_lab = (lab_g == c_iota).astype(f32)                         # (M, C)
    bbox_scores = jnp.dot(onehot_lab, ps_ref[...],
                          precision=lax.Precision.HIGHEST,
                          preferred_element_type=f32)                  # (M, A)
    labels_c = jnp.maximum(lab, 0)                                     # (M, 1) clamped

    # ---- IoU(gt, pred) -> (M, A) ----
    gx1, gy1, gx2, gy2 = gt_b[:, 0:1], gt_b[:, 1:2], gt_b[:, 2:3], gt_b[:, 3:4]
    px1, py1, px2, py2 = pd_b[0:1, :], pd_b[1:2, :], pd_b[2:3, :], pd_b[3:4, :]
    iw = jnp.maximum(jnp.minimum(gx2, px2) - jnp.maximum(gx1, px1), 0.0)
    ih = jnp.maximum(jnp.minimum(gy2, py2) - jnp.maximum(gy1, py1), 0.0)
    overlap = iw * ih
    area_g = jnp.maximum(gx2 - gx1, 0.0) * jnp.maximum(gy2 - gy1, 0.0)  # (M, 1)
    area_p = jnp.maximum(px2 - px1, 0.0) * jnp.maximum(py2 - py1, 0.0)  # (1, A)
    overlaps = overlap / (area_g + area_p - overlap + 1e-9)             # (M, A)

    align_metric = _ipow(bbox_scores, alpha) * _ipow(overlaps, beta)    # (M, A)

    # ---- anchor centers strictly inside the gt box ----
    acx, acy = anc[0:1, :], anc[1:2, :]
    min_d = jnp.minimum(jnp.minimum(acx - gx1, acy - gy1),
                        jnp.minimum(gx2 - acx, gy2 - acy))
    mask_in_gts = (min_d > eps).astype(f32)                             # (M, A)

    # ---- top-k candidates along anchors (iterative argmax, ties -> lowest idx) ----
    # TODO(synk): hierarchical (per-128-lane chunk) top-k for large A.
    metrics = align_metric * mask_in_gts
    a_iota = lax.broadcasted_iota(jnp.int32, (1, A), 1)                 # minimal-shape iota

    def topk_body(_, carry):
        work, picked = carry
        cur_max = jnp.max(work, axis=-1, keepdims=True)                 # (M, 1)
        sel = jnp.min(jnp.where(work == cur_max, a_iota, A), axis=-1, keepdims=True)
        first = a_iota == sel                                            # (M, A)
        picked = jnp.where(first, 1.0, picked)
        work = jnp.where(first, NEG, work)
        return work, picked

    _, is_in_topk = lax.fori_loop(0, topk, topk_body,
                                  (metrics, jnp.zeros_like(metrics)), unroll=True)
    # rows with mask_gt==0: torch forces all topk idxs to 0 -> count>1 -> zeroed row;
    # the mask_gt factor below reproduces that.
    mask_pos = is_in_topk * mask_in_gts * mask_gt                       # (M, A)

    # ---- resolve anchors matched to multiple gts by highest IoU ----
    fg = jnp.sum(mask_pos, axis=0, keepdims=True)                       # (1, A)
    m_iota = lax.broadcasted_iota(jnp.int32, (M, 1), 0)                 # minimal-shape iota
    ov_max = jnp.max(overlaps, axis=0, keepdims=True)
    ov_arg = jnp.min(jnp.where(overlaps == ov_max, m_iota, M), axis=0, keepdims=True)
    is_max = (m_iota == ov_arg).astype(f32)
    mask_pos = jnp.where(fg > 1.0, is_max, mask_pos)
    fg = jnp.sum(mask_pos, axis=0, keepdims=True)

    mp_max = jnp.max(mask_pos, axis=0, keepdims=True)
    tgt_idx = jnp.min(jnp.where(mask_pos == mp_max, m_iota, M), axis=0, keepdims=True)
    onehot_gt = m_iota == tgt_idx                                       # (M, A) bool
    onehot_gt_f = onehot_gt.astype(f32)

    # ---- get_targets (lane-dense outputs) ----
    tl = jnp.sum(jnp.where(onehot_gt, labels_c, 0), axis=0, keepdims=True)  # (1, A)
    tl_ref[...] = tl.astype(jnp.int32)

    tb_x1 = jnp.sum(onehot_gt_f * gx1, axis=0, keepdims=True)
    tb_y1 = jnp.sum(onehot_gt_f * gy1, axis=0, keepdims=True)
    tb_x2 = jnp.sum(onehot_gt_f * gx2, axis=0, keepdims=True)
    tb_y2 = jnp.sum(onehot_gt_f * gy2, axis=0, keepdims=True)
    tb_ref[...] = jnp.concatenate([tb_x1, tb_y1, tb_x2, tb_y2], axis=0)     # (4, A)

    # ---- normalized per-anchor score scale (dense one-hot is built OUTSIDE the kernel) --
    am = align_metric * mask_pos
    pos_am = jnp.max(am, axis=-1, keepdims=True)                        # (M, 1)
    pos_ov = jnp.max(overlaps * mask_pos, axis=-1, keepdims=True)       # (M, 1)
    r = pos_ov / (pos_am + eps)                                         # hoisted (M,1) divide
    norm = jnp.max(am * r, axis=0, keepdims=True)                       # (1, A)
    sc_ref[...] = jnp.where(fg > 0.0, norm, 0.0)                        # (1, A)

    fg_ref[...] = fg                                                    # (1, A)


def task_aligned_assigner(pd_scores, pd_bboxes, anc_points, gt_labels, gt_bboxes,
                          mask_gt, *, topk=13, num_classes=80, alpha=1.0, beta=6.0,
                          eps=1e-9):
    bs, A, C = pd_scores.shape
    M = gt_bboxes.shape[1]
    assert C == num_classes
    if M == 0:
        return (jnp.full((bs, A), num_classes, jnp.int32),
                jnp.zeros_like(pd_bboxes),
                jnp.zeros_like(pd_scores),
                jnp.zeros((bs, A), bool))

    f32 = jnp.float32
    A_pad = ((A + 127) // 128) * 128
    pad = A_pad - A

    ps = pd_scores.astype(f32)
    pb = pd_bboxes.astype(f32)
    ap = anc_points.astype(f32)
    if pad:
        ps = jnp.pad(ps, ((0, 0), (0, pad), (0, 0)))
        pb = jnp.pad(pb, ((0, 0), (0, pad), (0, 0)))
        # dummy anchors far outside every gt box -> mask_in_gts zeroes them
        ap = jnp.pad(ap, ((0, pad), (0, 0)), constant_values=-1e8)

    ps_ca = jnp.transpose(ps, (0, 2, 1))          # (bs, C, A_pad)  class-major
    pb_ca = jnp.transpose(pb, (0, 2, 1))          # (bs, 4, A_pad)  coord-major
    anc_ca = jnp.transpose(ap, (1, 0))            # (2, A_pad)      coord-major

    gl = gt_labels.reshape(bs, M, 1).astype(jnp.int32)
    gb = gt_bboxes.astype(f32)
    mg = mask_gt.reshape(bs, M, 1).astype(f32)

    kernel = functools.partial(_tal_kernel, topk=topk, alpha=alpha, beta=beta, eps=eps)

    out_shape = (
        jax.ShapeDtypeStruct((bs, 1, A_pad), jnp.int32),   # target_labels (lane-major)
        jax.ShapeDtypeStruct((bs, 4, A_pad), f32),         # target_bboxes (coord-major)
        jax.ShapeDtypeStruct((bs, 1, A_pad), f32),         # per-anchor score scale
        jax.ShapeDtypeStruct((bs, 1, A_pad), f32),         # fg counts
    )

    # Explicit VMEM budget (v5e default scoped limit is 16 MiB; v7x has 64 MiB physical).
    io_bytes = 2 * 4 * ((C + 4 + 2) * A_pad + 6 * M        # double-buffered inputs
                        + (1 + 4 + 1 + 1) * A_pad)          # double-buffered outputs
    work_bytes = 16 * M * A_pad * 4                         # ~16 live (M, A) f32 buffers
    vmem_budget = int(min(max(io_bytes + work_bytes + (4 << 20), 32 << 20), 100 << 20))

    grid_spec = pltpu.PrefetchScalarGridSpec(
        num_scalar_prefetch=0,
        grid=(bs,),
        in_specs=[
            pl.BlockSpec((None, C, A_pad), lambda b: (b, 0, 0)),   # pd_scores (C, A)
            pl.BlockSpec((None, 4, A_pad), lambda b: (b, 0, 0)),   # pd_bboxes (4, A)
            pl.BlockSpec((2, A_pad), lambda b: (0, 0)),            # anc_points (2, A)
            pl.BlockSpec((None, M, 1), lambda b: (b, 0, 0)),       # gt_labels
            pl.BlockSpec((None, M, 4), lambda b: (b, 0, 0)),       # gt_bboxes
            pl.BlockSpec((None, M, 1), lambda b: (b, 0, 0)),       # mask_gt
        ],
        out_specs=[
            pl.BlockSpec((None, 1, A_pad), lambda b: (b, 0, 0)),
            pl.BlockSpec((None, 4, A_pad), lambda b: (b, 0, 0)),
            pl.BlockSpec((None, 1, A_pad), lambda b: (b, 0, 0)),
            pl.BlockSpec((None, 1, A_pad), lambda b: (b, 0, 0)),
        ],
    )
    tl, tb, sc, fg = pl.pallas_call(
        kernel,
        out_shape=out_shape,
        grid_spec=grid_spec,
        compiler_params=pltpu.CompilerParams(
            dimension_semantics=("parallel",),
            vmem_limit_bytes=vmem_budget),
    )(ps_ca, pb_ca, anc_ca, gl, gb, mg)

    target_labels = tl[:, 0, :A]
    target_bboxes = jnp.transpose(tb, (0, 2, 1))[:, :A, :]
    scale = sc[:, 0, :A]
    fg_mask = fg[:, 0, :A] > 0
    # Compact one-hot scatter OUTSIDE the kernel (kernel no longer writes the dense
    # (C, A_pad) block to HBM); fuses into downstream loss consumption.
    target_scores = jax.nn.one_hot(target_labels, num_classes, dtype=f32) * scale[:, :, None]
    return target_labels, target_bboxes, target_scores, fg_mask


def _reference_tal(pd_scores, pd_bboxes, anc_points, gt_labels, gt_bboxes, mask_gt,
                   topk=13, num_classes=80, alpha=1.0, beta=6.0, eps=1e-9):
    """Pure-JAX port of the torch reference (for correctness check only)."""
    bs, A, C = pd_scores.shape
    M = gt_bboxes.shape[1]
    gl = gt_labels.reshape(bs, M).astype(jnp.int32)
    ps_t = jnp.transpose(pd_scores, (0, 2, 1))                               # (bs, C, A)
    bbox_scores = jnp.take_along_axis(ps_t, gl[:, :, None], axis=1)          # (bs, M, A)

    gb = gt_bboxes[:, :, None, :]
    pb = pd_bboxes[:, None, :, :]
    x1y1 = jnp.maximum(gb[..., 0:2], pb[..., 0:2])
    x2y2 = jnp.minimum(gb[..., 2:4], pb[..., 2:4])
    overlap = jnp.prod(jnp.clip(x2y2 - x1y1, 0, None), -1)
    area_g = jnp.prod(jnp.clip(gb[..., 2:4] - gb[..., 0:2], 0, None), -1)
    area_p = jnp.prod(jnp.clip(pb[..., 2:4] - pb[..., 0:2], 0, None), -1)
    overlaps = overlap / (area_g + area_p - overlap + 1e-9)                  # (bs, M, A)
    align_metric = _ipow(bbox_scores, alpha) * _ipow(overlaps, beta)

    xy = anc_points[None, None, :, :]
    deltas = jnp.concatenate([xy - gb[..., 0:2], gb[..., 2:4] - xy], -1)
    mask_in_gts = (jnp.min(deltas, -1) > eps).astype(jnp.float32)            # (bs, M, A)

    metrics = align_metric * mask_in_gts
    mg = mask_gt.reshape(bs, M, 1).astype(jnp.float32)
    _, topk_idx = jax.lax.top_k(metrics, topk)                               # (bs, M, k)
    topk_idx = jnp.where(mg.astype(bool), topk_idx, 0)
    cnt = jnp.sum(jax.nn.one_hot(topk_idx, A, dtype=jnp.float32), axis=-2)
    is_in_topk = jnp.where(cnt > 1, 0.0, cnt)
    mask_pos = is_in_topk * mask_in_gts * mg

    fg = mask_pos.sum(1)                                                     # (bs, A)
    max_idx = jnp.argmax(overlaps, axis=1)
    is_max = jnp.transpose(jax.nn.one_hot(max_idx, M, dtype=jnp.float32), (0, 2, 1))
    mask_pos = jnp.where(fg[:, None, :] > 1, is_max, mask_pos)
    fg = mask_pos.sum(1)
    tgt_idx = jnp.argmax(mask_pos, axis=1)                                   # (bs, A)

    lab_c = jnp.maximum(gl, 0)
    t_lab = jnp.take_along_axis(lab_c, tgt_idx, axis=1)
    t_box = jnp.take_along_axis(gt_bboxes, tgt_idx[:, :, None], axis=1)
    t_sc = jax.nn.one_hot(t_lab, C, dtype=jnp.float32)
    t_sc = jnp.where(fg[:, :, None] > 0, t_sc, 0.0)
    am = align_metric * mask_pos
    pos_am = am.max(-1, keepdims=True)
    pos_ov = (overlaps * mask_pos).max(-1, keepdims=True)
    norm = (am * pos_ov / (pos_am + eps)).max(1)[:, :, None]
    t_sc = t_sc * norm
    return t_lab, t_box, t_sc, fg > 0


if __name__ == "__main__":
    key = jax.random.PRNGKey(0)
    bs, A, M, C = 2, 128, 8, 80
    k1, k2, k3, k4, k5 = jax.random.split(key, 5)

    # anchor centers on a 16x8 unit-stride grid -> 128 anchors
    gx, gy = jnp.meshgrid(jnp.arange(16) + 0.5, jnp.arange(8) + 0.5, indexing="ij")
    anc_points = jnp.stack([gx.reshape(-1), gy.reshape(-1)], axis=-1).astype(jnp.float32)

    pd_scores = jax.nn.sigmoid(jax.random.normal(k1, (bs, A, C), jnp.float32))
    wh = 0.5 + 2.5 * jax.random.uniform(k2, (bs, A, 2), jnp.float32)
    ctr = anc_points[None, :, :]
    pd_bboxes = jnp.concatenate([ctr - wh / 2, ctr + wh / 2], axis=-1)

    g_ctr = jax.random.uniform(k3, (bs, M, 2), jnp.float32) * jnp.array([16.0, 8.0])
    g_wh = 2.0 + 4.0 * jax.random.uniform(k4, (bs, M, 2), jnp.float32)
    gt_bboxes = jnp.concatenate([g_ctr - g_wh / 2, g_ctr + g_wh / 2], axis=-1)
    gt_labels = jax.random.randint(k5, (bs, M, 1), 0, C).astype(jnp.int32)
    mask_gt = jnp.concatenate(
        [jnp.ones((bs, M - 2, 1)), jnp.zeros((bs, 2, 1))], axis=1).astype(jnp.float32)

    out = task_aligned_assigner(pd_scores, pd_bboxes, anc_points, gt_labels,
                                gt_bboxes, mask_gt)
    jax.block_until_ready(out)
    tl, tb, ts, fg = out
    assert tl.shape == (bs, A) and tb.shape == (bs, A, 4)
    assert ts.shape == (bs, A, C) and fg.shape == (bs, A) and fg.dtype == jnp.bool_

    # correctness check against a pure-JAX port of the torch reference
    rl, rb, rs, rf = _reference_tal(pd_scores, pd_bboxes, anc_points, gt_labels,
                                    gt_bboxes, mask_gt)
    assert np.array_equal(np.asarray(fg), np.asarray(rf))
    assert np.array_equal(np.asarray(tl), np.asarray(rl))
    assert np.allclose(np.asarray(tb), np.asarray(rb), atol=1e-4, rtol=1e-4)
    assert np.allclose(np.asarray(ts), np.asarray(rs), atol=1e-4, rtol=1e-4)

    print("KERNEL_OK")
</pallas_src>

<mosaic_0001>
module attributes {stable_mosaic.version = 11 : i64} {
  func.func @_tal_kernel(%arg0: i32, %arg1: memref<1x80x128xf32, #tpu.memory_space<vmem>>, %arg2: memref<1x4x128xf32, #tpu.memory_space<vmem>>, %arg3: memref<2x128xf32, #tpu.memory_space<vmem>>, %arg4: memref<1x8x1xi32, #tpu.memory_space<vmem>>, %arg5: memref<1x8x4xf32, #tpu.memory_space<vmem>>, %arg6: memref<1x8x1xf32, #tpu.memory_space<vmem>>, %arg7: memref<1x1x128xi32, #tpu.memory_space<vmem>>, %arg8: memref<1x4x128xf32, #tpu.memory_space<vmem>>, %arg9: memref<1x1x128xf32, #tpu.memory_space<vmem>>, %arg10: memref<1x1x128xf32, #tpu.memory_space<vmem>>) attributes {dimension_semantics = [#tpu.dimension_semantics<parallel>], iteration_bounds = array<i64: 2>, scalar_prefetch = 0 : i64, scratch_operands = 0 : i64, tpu.core_type = #tpu.core_type<tc>, window_params = [{transform_indices = @transform_0, window_bounds = array<i64: 1, 80, 128>}, {transform_indices = @transform_1, window_bounds = array<i64: 1, 4, 128>}, {pipeline_mode = #tpu.pipeline_mode<synchronous>, transform_indices = @transform_2, window_bounds = array<i64: 2, 128>}, {transform_indices = @transform_3, window_bounds = array<i64: 1, 8, 1>}, {transform_indices = @transform_4, window_bounds = array<i64: 1, 8, 4>}, {transform_indices = @transform_5, window_bounds = array<i64: 1, 8, 1>}, {transform_indices = @transform_6, window_bounds = array<i64: 1, 1, 128>}, {transform_indices = @transform_7, window_bounds = array<i64: 1, 4, 128>}, {transform_indices = @transform_8, window_bounds = array<i64: 1, 1, 128>}, {transform_indices = @transform_9, window_bounds = array<i64: 1, 1, 128>}]} {
    %c0 = arith.constant 0 : index
    %c0_0 = arith.constant 0 : index
    %c0_1 = arith.constant 0 : index
    %0 = vector.load %arg2[%c0, %c0_0, %c0_1] : memref<1x4x128xf32, #tpu.memory_space<vmem>>, vector<1x4x128xf32>
    %1 = vector.shape_cast %0 : vector<1x4x128xf32> to vector<4x128xf32>
    %c0_2 = arith.constant 0 : index
    %c0_3 = arith.constant 0 : index
    %2 = vector.load %arg3[%c0_2, %c0_3] : memref<2x128xf32, #tpu.memory_space<vmem>>, vector<2x128xf32>
    %c0_4 = arith.constant 0 : index
    %c0_5 = arith.constant 0 : index
    %c0_6 = arith.constant 0 : index
    %3 = vector.load %arg5[%c0_4, %c0_5, %c0_6] : memref<1x8x4xf32, #tpu.memory_space<vmem>>, vector<1x8x4xf32>
    %4 = vector.shape_cast %3 : vector<1x8x4xf32> to vector<8x4xf32>
    %c0_7 = arith.constant 0 : index
    %c0_8 = arith.constant 0 : index
    %c0_9 = arith.constant 0 : index
    %5 = vector.load %arg6[%c0_7, %c0_8, %c0_9] : memref<1x8x1xf32, #tpu.memory_space<vmem>>, vector<1x8x1xf32>
    %6 = vector.shape_cast %5 : vector<1x8x1xf32> to vector<8x1xf32>
    %c0_10 = arith.constant 0 : index
    %c0_11 = arith.constant 0 : index
    %c0_12 = arith.constant 0 : index
    %7 = vector.load %arg4[%c0_10, %c0_11, %c0_12] : memref<1x8x1xi32, #tpu.memory_space<vmem>>, vector<1x8x1xi32>
    %8 = vector.shape_cast %7 : vector<1x8x1xi32> to vector<8x1xi32>
    %c0_i32 = arith.constant 0 : i32
    %9 = vector.broadcast %c0_i32 : i32 to vector<8x1xi32>
    %10 = arith.cmpi slt, %8, %9 : vector<8x1xi32>
    %c80_i32 = arith.constant 80 : i32
    %11 = vector.broadcast %c80_i32 : i32 to vector<8x1xi32>
    %12 = arith.addi %8, %11 : vector<8x1xi32>
    %13 = arith.select %10, %12, %8 : vector<8x1xi1>, vector<8x1xi32>
    %c0_i32_13 = arith.constant 0 : i32
    %c79_i32 = arith.constant 79 : i32
    %14 = vector.broadcast %c0_i32_13 : i32 to vector<8x1xi32>
    %15 = arith.maxsi %14, %13 : vector<8x1xi32>
    %16 = vector.broadcast %c79_i32 : i32 to vector<8x1xi32>
    %17 = arith.minsi %16, %15 : vector<8x1xi32>
    %18 = tpu.iota {dimensions = array<i32: 1>} : vector<1x80xi32>
    %19 = vector.broadcast %17 : vector<8x1xi32> to vector<8x80xi32>
    %20 = vector.broadcast %18 : vector<1x80xi32> to vector<8x80xi32>
    %21 = arith.cmpi eq, %19, %20 : vector<8x80xi32>
    %22 = arith.extui %21 : vector<8x80xi1> to vector<8x80xi32>
    %23 = arith.sitofp %22 : vector<8x80xi32> to vector<8x80xf32>
    %c0_14 = arith.constant 0 : index
    %c0_15 = arith.constant 0 : index
    %c0_16 = arith.constant 0 : index
    %24 = vector.load %arg1[%c0_14, %c0_15, %c0_16] : memref<1x80x128xf32, #tpu.memory_space<vmem>>, vector<1x80x128xf32>
    %25 = vector.shape_cast %24 : vector<1x80x128xf32> to vector<80x128xf32>
    %cst = arith.constant dense<0.000000e+00> : vector<8x128xf32>
    %26 = tpu.matmul %23, %25, %cst {dimension_numbers = #tpu.dot_dimension_numbers<[1], [0], [0], [1], [0, 0, 1, 1], [], []>, precision = #tpu.contract_precision<fp32>} : vector<8x80xf32>, vector<80x128xf32>, vector<8x128xf32> -> vector<8x128xf32>
    %c0_i32_17 = arith.constant 0 : i32
    %27 = vector.broadcast %c0_i32_17 : i32 to vector<8x1xi32>
    %28 = arith.maxsi %8, %27 : vector<8x1xi32>
    %29 = vector.extract_strided_slice %4 {offsets = [0, 0], sizes = [8, 1], strides = [1, 1]} : vector<8x4xf32> to vector<8x1xf32>
    %30 = vector.extract_strided_slice %4 {offsets = [0, 1], sizes = [8, 1], strides = [1, 1]} : vector<8x4xf32> to vector<8x1xf32>
    %31 = vector.extract_strided_slice %4 {offsets = [0, 2], sizes = [8, 1], strides = [1, 1]} : vector<8x4xf32> to vector<8x1xf32>
    %32 = vector.extract_strided_slice %4 {offsets = [0, 3], sizes = [8, 1], strides = [1, 1]} : vector<8x4xf32> to vector<8x1xf32>
    %33 = vector.extract_strided_slice %1 {offsets = [0, 0], sizes = [1, 128], strides = [1, 1]} : vector<4x128xf32> to vector<1x128xf32>
    %34 = vector.extract_strided_slice %1 {offsets = [1, 0], sizes = [1, 128], strides = [1, 1]} : vector<4x128xf32> to vector<1x128xf32>
    %35 = vector.extract_strided_slice %1 {offsets = [2, 0], sizes = [1, 128], strides = [1, 1]} : vector<4x128xf32> to vector<1x128xf32>
    %36 = vector.extract_strided_slice %1 {offsets = [3, 0], sizes = [1, 128], strides = [1, 1]} : vector<4x128xf32> to vector<1x128xf32>
    %37 = vector.broadcast %31 : vector<8x1xf32> to vector<8x128xf32>
    %38 = vector.broadcast %35 : vector<1x128xf32> to vector<8x128xf32>
    %39 = arith.minimumf %37, %38 : vector<8x128xf32>
    %40 = vector.broadcast %29 : vector<8x1xf32> to vector<8x128xf32>
    %41 = vector.broadcast %33 : vector<1x128xf32> to vector<8x128xf32>
    %42 = arith.maximumf %40, %41 : vector<8x128xf32>
    %43 = arith.subf %39, %42 : vector<8x128xf32>
    %cst_18 = arith.constant 0.000000e+00 : f32
    %44 = vector.broadcast %cst_18 : f32 to vector<8x128xf32>
    %45 = arith.maximumf %43, %44 : vector<8x128xf32>
    %46 = vector.broadcast %32 : vector<8x1xf32> to vector<8x128xf32>
    %47 = vector.broadcast %36 : vector<1x128xf32> to vector<8x128xf32>
    %48 = arith.minimumf %46, %47 : vector<8x128xf32>
    %49 = vector.broadcast %30 : vector<8x1xf32> to vector<8x128xf32>
    %50 = vector.broadcast %34 : vector<1x128xf32> to vector<8x128xf32>
    %51 = arith.maximumf %49, %50 : vector<8x128xf32>
    %52 = arith.subf %48, %51 : vector<8x128xf32>
    %cst_19 = arith.constant 0.000000e+00 : f32
    %53 = vector.broadcast %cst_19 : f32 to vector<8x128xf32>
    %54 = arith.maximumf %52, %53 : vector<8x128xf32>
    %55 = arith.mulf %45, %54 : vector<8x128xf32>
    %56 = arith.subf %31, %29 : vector<8x1xf32>
    %cst_20 = arith.constant 0.000000e+00 : f32
    %57 = vector.broadcast %cst_20 : f32 to vector<8x1xf32>
    %58 = arith.maximumf %56, %57 : vector<8x1xf32>
    %59 = arith.subf %32, %30 : vector<8x1xf32>
    %cst_21 = arith.constant 0.000000e+00 : f32
    %60 = vector.broadcast %cst_21 : f32 to vector<8x1xf32>
    %61 = arith.maximumf %59, %60 : vector<8x1xf32>
    %62 = arith.mulf %58, %61 : vector<8x1xf32>
    %63 = arith.subf %35, %33 : vector<1x128xf32>
    %cst_22 = arith.constant 0.000000e+00 : f32
    %64 = vector.broadcast %cst_22 : f32 to vector<1x128xf32>
    %65 = arith.maximumf %63, %64 : vector<1x128xf32>
    %66 = arith.subf %36, %34 : vector<1x128xf32>
    %cst_23 = arith.constant 0.000000e+00 : f32
    %67 = vector.broadcast %cst_23 : f32 to vector<1x128xf32>
    %68 = arith.maximumf %66, %67 : vector<1x128xf32>
    %69 = arith.mulf %65, %68 : vector<1x128xf32>
    %70 = vector.broadcast %62 : vector<8x1xf32> to vector<8x128xf32>
    %71 = vector.broadcast %69 : vector<1x128xf32> to vector<8x128xf32>
    %72 = arith.addf %70, %71 : vector<8x128xf32>
    %73 = arith.subf %72, %55 : vector<8x128xf32>
    %cst_24 = arith.constant 9.99999971E-10 : f32
    %74 = vector.broadcast %cst_24 : f32 to vector<8x128xf32>
    %75 = arith.addf %73, %74 : vector<8x128xf32>
    %76 = arith.divf %55, %75 : vector<8x128xf32>
    %77 = arith.mulf %76, %76 : vector<8x128xf32>
    %78 = arith.mulf %77, %77 : vector<8x128xf32>
    %79 = arith.mulf %77, %78 : vector<8x128xf32>
    %80 = arith.mulf %26, %79 : vector<8x128xf32>
    %81 = vector.extract_strided_slice %2 {offsets = [0, 0], sizes = [1, 128], strides = [1, 1]} : vector<2x128xf32> to vector<1x128xf32>
    %82 = vector.extract_strided_slice %2 {offsets = [1, 0], sizes = [1, 128], strides = [1, 1]} : vector<2x128xf32> to vector<1x128xf32>
    %83 = vector.broadcast %81 : vector<1x128xf32> to vector<8x128xf32>
    %84 = vector.broadcast %29 : vector<8x1xf32> to vector<8x128xf32>
    %85 = arith.subf %83, %84 : vector<8x128xf32>
    %86 = vector.broadcast %82 : vector<1x128xf32> to vector<8x128xf32>
    %87 = vector.broadcast %30 : vector<8x1xf32> to vector<8x128xf32>
    %88 = arith.subf %86, %87 : vector<8x128xf32>
    %89 = arith.minimumf %85, %88 : vector<8x128xf32>
    %90 = vector.broadcast %31 : vector<8x1xf32> to vector<8x128xf32>
    %91 = vector.broadcast %81 : vector<1x128xf32> to vector<8x128xf32>
    %92 = arith.subf %90, %91 : vector<8x128xf32>
    %93 = vector.broadcast %32 : vector<8x1xf32> to vector<8x128xf32>
    %94 = vector.broadcast %82 : vector<1x128xf32> to vector<8x128xf32>
    %95 = arith.subf %93, %94 : vector<8x128xf32>
    %96 = arith.minimumf %92, %95 : vector<8x128xf32>
    %97 = arith.minimumf %89, %96 : vector<8x128xf32>
    %cst_25 = arith.constant 9.99999971E-10 : f32
    %98 = vector.broadcast %cst_25 : f32 to vector<8x128xf32>
    %99 = arith.cmpf ogt, %97, %98 : vector<8x128xf32>
    %100 = arith.extui %99 : vector<8x128xi1> to vector<8x128xi32>
    %101 = arith.sitofp %100 : vector<8x128xi32> to vector<8x128xf32>
    %102 = arith.mulf %80, %101 : vector<8x128xf32>
    %103 = tpu.iota {dimensions = array<i32: 1>} : vector<1x128xi32>
    %cst_26 = arith.constant 0.000000e+00 : f32
    %104 = vector.broadcast %cst_26 : f32 to vector<8x128xf32>
    %c0_i32_27 = arith.constant 0 : i32
    %cst_28 = arith.constant dense<0xFF800000> : vector<8xf32>
    %105 = vector.multi_reduction <maximumf>, %102, %cst_28 [1] : vector<8x128xf32> to vector<8xf32>
    %106 = vector.shape_cast %105 : vector<8xf32> to vector<8x1xf32>
    %107 = vector.broadcast %106 : vector<8x1xf32> to vector<8x128xf32>
    %108 = arith.cmpf oeq, %102, %107 : vector<8x128xf32>
    %c128_i32 = arith.constant 128 : i32
    %109 = vector.shape_cast %103 : vector<1x128xi32> to vector<1x128xi32>
    %110 = vector.broadcast %109 : vector<1x128xi32> to vector<8x128xi32>
    %111 = vector.broadcast %c128_i32 : i32 to vector<8x128xi32>
    %112 = arith.select %108, %110, %111 : vector<8x128xi1>, vector<8x128xi32>
    %cst_29 = arith.constant dense<2147483647> : vector<8xi32>
    %113 = vector.multi_reduction <minsi>, %112, %cst_29 [1] : vector<8x128xi32> to vector<8xi32>
    %114 = vector.shape_cast %113 : vector<8xi32> to vector<8x1xi32>
    %115 = vector.broadcast %103 : vector<1x128xi32> to vector<8x128xi32>
    %116 = vector.broadcast %114 : vector<8x1xi32> to vector<8x128xi32>
    %117 = arith.cmpi eq, %115, %116 : vector<8x128xi32>
    %cst_30 = arith.constant 1.000000e+00 : f32
    %118 = vector.broadcast %cst_30 : f32 to vector<8x128xf32>
    %119 = arith.select %117, %118, %104 : vector<8x128xi1>, vector<8x128xf32>
    %cst_31 = arith.constant -3.40282347E+38 : f32
    %120 = vector.broadcast %cst_31 : f32 to vector<8x128xf32>
    %121 = arith.select %117, %120, %102 : vector<8x128xi1>, vector<8x128xf32>
    %c1_i32 = arith.constant 1 : i32
    %cst_32 = arith.constant dense<0xFF800000> : vector<8xf32>
    %122 = vector.multi_reduction <maximumf>, %121, %cst_32 [1] : vector<8x128xf32> to vector<8xf32>
    %123 = vector.shape_cast %122 : vector<8xf32> to vector<8x1xf32>
    %124 = vector.broadcast %123 : vector<8x1xf32> to vector<8x128xf32>
    %125 = arith.cmpf oeq, %121, %124 : vector<8x128xf32>
    %c128_i32_33 = arith.constant 128 : i32
    %126 = vector.shape_cast %103 : vector<1x128xi32> to vector<1x128xi32>
    %127 = vector.broadcast %126 : vector<1x128xi32> to vector<8x128xi32>
    %128 = vector.broadcast %c128_i32_33 : i32 to vector<8x128xi32>
    %129 = arith.select %125, %127, %128 : vector<8x128xi1>, vector<8x128xi32>
    %cst_34 = arith.constant dense<2147483647> : vector<8xi32>
    %130 = vector.multi_reduction <minsi>, %129, %cst_34 [1] : vector<8x128xi32> to vector<8xi32>
    %131 = vector.shape_cast %130 : vector<8xi32> to vector<8x1xi32>
    %132 = vector.broadcast %103 : vector<1x128xi32> to vector<8x128xi32>
    %133 = vector.broadcast %131 : vector<8x1xi32> to vector<8x128xi32>
    %134 = arith.cmpi eq, %132, %133 : vector<8x128xi32>
    %cst_35 = arith.constant 1.000000e+00 : f32
    %135 = vector.broadcast %cst_35 : f32 to vector<8x128xf32>
    %136 = arith.select %134, %135, %119 : vector<8x128xi1>, vector<8x128xf32>
    %cst_36 = arith.constant -3.40282347E+38 : f32
    %137 = vector.broadcast %cst_36 : f32 to vector<8x128xf32>
    %138 = arith.select %134, %137, %121 : vector<8x128xi1>, vector<8x128xf32>
    %c2_i32 = arith.constant 2 : i32
    %cst_37 = arith.constant dense<0xFF800000> : vector<8xf32>
    %139 = vector.multi_reduction <maximumf>, %138, %cst_37 [1] : vector<8x128xf32> to vector<8xf32>
    %140 = vector.shape_cast %139 : vector<8xf32> to vector<8x1xf32>
    %141 = vector.broadcast %140 : vector<8x1xf32> to vector<8x128xf32>
    %142 = arith.cmpf oeq, %138, %141 : vector<8x128xf32>
    %c128_i32_38 = arith.constant 128 : i32
    %143 = vector.shape_cast %103 : vector<1x128xi32> to vector<1x128xi32>
    %144 = vector.broadcast %143 : vector<1x128xi32> to vector<8x128xi32>
    %145 = vector.broadcast %c128_i32_38 : i32 to vector<8x128xi32>
    %146 = arith.select %142, %144, %145 : vector<8x128xi1>, vector<8x128xi32>
    %cst_39 = arith.constant dense<2147483647> : vector<8xi32>
    %147 = vector.multi_reduction <minsi>, %146, %cst_39 [1] : vector<8x128xi32> to vector<8xi32>
    %148 = vector.shape_cast %147 : vector<8xi32> to vector<8x1xi32>
    %149 = vector.broadcast %103 : vector<1x128xi32> to vector<8x128xi32>
    %150 = vector.broadcast %148 : vector<8x1xi32> to vector<8x128xi32>
    %151 = arith.cmpi eq, %149, %150 : vector<8x128xi32>
    %cst_40 = arith.constant 1.000000e+00 : f32
    %152 = vector.broadcast %cst_40 : f32 to vector<8x128xf32>
    %153 = arith.select %151, %152, %136 : vector<8x128xi1>, vector<8x128xf32>
    %cst_41 = arith.constant -3.40282347E+38 : f32
    %154 = vector.broadcast %cst_41 : f32 to vector<8x128xf32>
    %155 = arith.select %151, %154, %138 : vector<8x128xi1>, vector<8x128xf32>
    %c3_i32 = arith.constant 3 : i32
    %cst_42 = arith.constant dense<0xFF800000> : vector<8xf32>
    %156 = vector.multi_reduction <maximumf>, %155, %cst_42 [1] : vector<8x128xf32> to vector<8xf32>
    %157 = vector.shape_cast %156 : vector<8xf32> to vector<8x1xf32>
    %158 = vector.broadcast %157 : vector<8x1xf32> to vector<8x128xf32>
    %159 = arith.cmpf oeq, %155, %158 : vector<8x128xf32>
    %c128_i32_43 = arith.constant 128 : i32
    %160 = vector.shape_cast %103 : vector<1x128xi32> to vector<1x128xi32>
    %161 = vector.broadcast %160 : vector<1x128xi32> to vector<8x128xi32>
    %162 = vector.broadcast %c128_i32_43 : i32 to vector<8x128xi32>
    %163 = arith.select %159, %161, %162 : vector<8x128xi1>, vector<8x128xi32>
    %cst_44 = arith.constant dense<2147483647> : vector<8xi32>
    %164 = vector.multi_reduction <minsi>, %163, %cst_44 [1] : vector<8x128xi32> to vector<8xi32>
    %165 = vector.shape_cast %164 : vector<8xi32> to vector<8x1xi32>
    %166 = vector.broadcast %103 : vector<1x128xi32> to vector<8x128xi32>
    %167 = vector.broadcast %165 : vector<8x1xi32> to vector<8x128xi32>
    %168 = arith.cmpi eq, %166, %167 : vector<8x128xi32>
    %cst_45 = arith.constant 1.000000e+00 : f32
    %169 = vector.broadcast %cst_45 : f32 to vector<8x128xf32>
    %170 = arith.select %168, %169, %153 : vector<8x128xi1>, vector<8x128xf32>
    %cst_46 = arith.constant -3.40282347E+38 : f32
    %171 = vector.broadcast %cst_46 : f32 to vector<8x128xf32>
    %172 = arith.select %168, %171, %155 : vector<8x128xi1>, vector<8x128xf32>
    %c4_i32 = arith.constant 4 : i32
    %cst_47 = arith.constant dense<0xFF800000> : vector<8xf32>
    %173 = vector.multi_reduction <maximumf>, %172, %cst_47 [1] : vector<8x128xf32> to vector<8xf32>
    %174 = vector.shape_cast %173 : vector<8xf32> to vector<8x1xf32>
    %175 = vector.broadcast %174 : vector<8x1xf32> to vector<8x128xf32>
    %176 = arith.cmpf oeq, %172, %175 : vector<8x128xf32>
    %c128_i32_48 = arith.constant 128 : i32
    %177 = vector.shape_cast %103 : vector<1x128xi32> to vector<1x128xi32>
    %178 = vector.broadcast %177 : vector<1x128xi32> to vector<8x128xi32>
    %179 = vector.broadcast %c128_i32_48 : i32 to vector<8x128xi32>
    %180 = arith.select %176, %178, %179 : vector<8x128xi1>, vector<8x128xi32>
    %cst_49 = arith.constant dense<2147483647> : vector<8xi32>
    %181 = vector.multi_reduction <minsi>, %180, %cst_49 [1] : vector<8x128xi32> to vector<8xi32>
    %182 = vector.shape_cast %181 : vector<8xi32> to vector<8x1xi32>
    %183 = vector.broadcast %103 : vector<1x128xi32> to vector<8x128xi32>
    %184 = vector.broadcast %182 : vector<8x1xi32> to vector<8x128xi32>
    %185 = arith.cmpi eq, %183, %184 : vector<8x128xi32>
    %cst_50 = arith.constant 1.000000e+00 : f32
    %186 = vector.broadcast %cst_50 : f32 to vector<8x128xf32>
    %187 = arith.select %185, %186, %170 : vector<8x128xi1>, vector<8x128xf32>
    %cst_51 = arith.constant -3.40282347E+38 : f32
    %188 = vector.broadcast %cst_51 : f32 to vector<8x128xf32>
    %189 = arith.select %185, %188, %172 : vector<8x128xi1>, vector<8x128xf32>
    %c5_i32 = arith.constant 5 : i32
    %cst_52 = arith.constant dense<0xFF800000> : vector<8xf32>
    %190 = vector.multi_reduction <maximumf>, %189, %cst_52 [1] : vector<8x128xf32> to vector<8xf32>
    %191 = vector.shape_cast %190 : vector<8xf32> to vector<8x1xf32>
    %192 = vector.broadcast %191 : vector<8x1xf32> to vector<8x128xf32>
    %193 = arith.cmpf oeq, %189, %192 : vector<8x128xf32>
    %c128_i32_53 = arith.constant 128 : i32
    %194 = vector.shape_cast %103 : vector<1x128xi32> to vector<1x128xi32>
    %195 = vector.broadcast %194 : vector<1x128xi32> to vector<8x128xi32>
    %196 = vector.broadcast %c128_i32_53 : i32 to vector<8x128xi32>
    %197 = arith.select %193, %195, %196 : vector<8x128xi1>, vector<8x128xi32>
    %cst_54 = arith.constant dense<2147483647> : vector<8xi32>
    %198 = vector.multi_reduction <minsi>, %197, %cst_54 [1] : vector<8x128xi32> to vector<8xi32>
    %199 = vector.shape_cast %198 : vector<8xi32> to vector<8x1xi32>
    %200 = vector.broadcast %103 : vector<1x128xi32> to vector<8x128xi32>
    %201 = vector.broadcast %199 : vector<8x1xi32> to vector<8x128xi32>
    %202 = arith.cmpi eq, %200, %201 : vector<8x128xi32>
    %cst_55 = arith.constant 1.000000e+00 : f32
    %203 = vector.broadcast %cst_55 : f32 to vector<8x128xf32>
    %204 = arith.select %202, %203, %187 : vector<8x128xi1>, vector<8x128xf32>
    %cst_56 = arith.constant -3.40282347E+38 : f32
    %205 = vector.broadcast %cst_56 : f32 to vector<8x128xf32>
    %206 = arith.select %202, %205, %189 : vector<8x128xi1>, vector<8x128xf32>
    %c6_i32 = arith.constant 6 : i32
    %cst_57 = arith.constant dense<0xFF800000> : vector<8xf32>
    %207 = vector.multi_reduction <maximumf>, %206, %cst_57 [1] : vector<8x128xf32> to vector<8xf32>
    %208 = vector.shape_cast %207 : vector<8xf32> to vector<8x1xf32>
    %209 = vector.broadcast %208 : vector<8x1xf32> to vector<8x128xf32>
    %210 = arith.cmpf oeq, %206, %209 : vector<8x128xf32>
    %c128_i32_58 = arith.constant 128 : i32
    %211 = vector.shape_cast %103 : vector<1x128xi32> to vector<1x128xi32>
    %212 = vector.broadcast %211 : vector<1x128xi32> to vector<8x128xi32>
    %213 = vector.broadcast %c128_i32_58 : i32 to vector<8x128xi32>
    %214 = arith.select %210, %212, %213 : vector<8x128xi1>, vector<8x128xi32>
    %cst_59 = arith.constant dense<2147483647> : vector<8xi32>
    %215 = vector.multi_reduction <minsi>, %214, %cst_59 [1] : vector<8x128xi32> to vector<8xi32>
    %216 = vector.shape_cast %215 : vector<8xi32> to vector<8x1xi32>
    %217 = vector.broadcast %103 : vector<1x128xi32> to vector<8x128xi32>
    %218 = vector.broadcast %216 : vector<8x1xi32> to vector<8x128xi32>
    %219 = arith.cmpi eq, %217, %218 : vector<8x128xi32>
    %cst_60 = arith.constant 1.000000e+00 : f32
    %220 = vector.broadcast %cst_60 : f32 to vector<8x128xf32>
    %221 = arith.select %219, %220, %204 : vector<8x128xi1>, vector<8x128xf32>
    %cst_61 = arith.constant -3.40282347E+38 : f32
    %222 = vector.broadcast %cst_61 : f32 to vector<8x128xf32>
    %223 = arith.select %219, %222, %206 : vector<8x128xi1>, vector<8x128xf32>
    %c7_i32 = arith.constant 7 : i32
    %cst_62 = arith.constant dense<0xFF800000> : vector<8xf32>
    %224 = vector.multi_reduction <maximumf>, %223, %cst_62 [1] : vector<8x128xf32> to vector<8xf32>
    %225 = vector.shape_cast %224 : vector<8xf32> to vector<8x1xf32>
    %226 = vector.broadcast %225 : vector<8x1xf32> to vector<8x128xf32>
    %227 = arith.cmpf oeq, %223, %226 : vector<8x128xf32>
    %c128_i32_63 = arith.constant 128 : i32
    %228 = vector.shape_cast %103 : vector<1x128xi32> to vector<1x128xi32>
    %229 = vector.broadcast %228 : vector<1x128xi32> to vector<8x128xi32>
    %230 = vector.broadcast %c128_i32_63 : i32 to vector<8x128xi32>
    %231 = arith.select %227, %229, %230 : vector<8x128xi1>, vector<8x128xi32>
    %cst_64 = arith.constant dense<2147483647> : vector<8xi32>
    %232 = vector.multi_reduction <minsi>, %231, %cst_64 [1] : vector<8x128xi32> to vector<8xi32>
    %233 = vector.shape_cast %232 : vector<8xi32> to vector<8x1xi32>
    %234 = vector.broadcast %103 : vector<1x128xi32> to vector<8x128xi32>
    %235 = vector.broadcast %233 : vector<8x1xi32> to vector<8x128xi32>
    %236 = arith.cmpi eq, %234, %235 : vector<8x128xi32>
    %cst_65 = arith.constant 1.000000e+00 : f32
    %237 = vector.broadcast %cst_65 : f32 to vector<8x128xf32>
    %238 = arith.select %236, %237, %221 : vector<8x128xi1>, vector<8x128xf32>
    %cst_66 = arith.constant -3.40282347E+38 : f32
    %239 = vector.broadcast %cst_66 : f32 to vector<8x128xf32>
    %240 = arith.select %236, %239, %223 : vector<8x128xi1>, vector<8x128xf32>
    %c8_i32 = arith.constant 8 : i32
    %cst_67 = arith.constant dense<0xFF800000> : vector<8xf32>
    %241 = vector.multi_reduction <maximumf>, %240, %cst_67 [1] : vector<8x128xf32> to vector<8xf32>
    %242 = vector.shape_cast %241 : vector<8xf32> to vector<8x1xf32>
    %243 = vector.broadcast %242 : vector<8x1xf32> to vector<8x128xf32>
    %244 = arith.cmpf oeq, %240, %243 : vector<8x128xf32>
    %c128_i32_68 = arith.constant 128 : i32
    %245 = vector.shape_cast %103 : vector<1x128xi32> to vector<1x128xi32>
    %246 = vector.broadcast %245 : vector<1x128xi32> to vector<8x128xi32>
    %247 = vector.broadcast %c128_i32_68 : i32 to vector<8x128xi32>
    %248 = arith.select %244, %246, %247 : vector<8x128xi1>, vector<8x128xi32>
    %cst_69 = arith.constant dense<2147483647> : vector<8xi32>
    %249 = vector.multi_reduction <minsi>, %248, %cst_69 [1] : vector<8x128xi32> to vector<8xi32>
    %250 = vector.shape_cast %249 : vector<8xi32> to vector<8x1xi32>
    %251 = vector.broadcast %103 : vector<1x128xi32> to vector<8x128xi32>
    %252 = vector.broadcast %250 : vector<8x1xi32> to vector<8x128xi32>
    %253 = arith.cmpi eq, %251, %252 : vector<8x128xi32>
    %cst_70 = arith.constant 1.000000e+00 : f32
    %254 = vector.broadcast %cst_70 : f32 to vector<8x128xf32>
    %255 = arith.select %253, %254, %238 : vector<8x128xi1>, vector<8x128xf32>
    %cst_71 = arith.constant -3.40282347E+38 : f32
    %256 = vector.broadcast %cst_71 : f32 to vector<8x128xf32>
    %257 = arith.select %253, %256, %240 : vector<8x128xi1>, vector<8x128xf32>
    %c9_i32 = arith.constant 9 : i32
    %cst_72 = arith.constant dense<0xFF800000> : vector<8xf32>
    %258 = vector.multi_reduction <maximumf>, %257, %cst_72 [1] : vector<8x128xf32> to vector<8xf32>
    %259 = vector.shape_cast %258 : vector<8xf32> to vector<8x1xf32>
    %260 = vector.broadcast %259 : vector<8x1xf32> to vector<8x128xf32>
    %261 = arith.cmpf oeq, %257, %260 : vector<8x128xf32>
    %c128_i32_73 = arith.constant 128 : i32
    %262 = vector.shape_cast %103 : vector<1x128xi32> to vector<1x128xi32>
    %263 = vector.broadcast %262 : vector<1x128xi32> to vector<8x128xi32>
    %264 = vector.broadcast %c128_i32_73 : i32 to vector<8x128xi32>
    %265 = arith.select %261, %263, %264 : vector<8x128xi1>, vector<8x128xi32>
    %cst_74 = arith.constant dense<2147483647> : vector<8xi32>
    %266 = vector.multi_reduction <minsi>, %265, %cst_74 [1] : vector<8x128xi32> to vector<8xi32>
    %267 = vector.shape_cast %266 : vector<8xi32> to vector<8x1xi32>
    %268 = vector.broadcast %103 : vector<1x128xi32> to vector<8x128xi32>
    %269 = vector.broadcast %267 : vector<8x1xi32> to vector<8x128xi32>
    %270 = arith.cmpi eq, %268, %269 : vector<8x128xi32>
    %cst_75 = arith.constant 1.000000e+00 : f32
    %271 = vector.broadcast %cst_75 : f32 to vector<8x128xf32>
    %272 = arith.select %270, %271, %255 : vector<8x128xi1>, vector<8x128xf32>
    %cst_76 = arith.constant -3.40282347E+38 : f32
    %273 = vector.broadcast %cst_76 : f32 to vector<8x128xf32>
    %274 = arith.select %270, %273, %257 : vector<8x128xi1>, vector<8x128xf32>
    %c10_i32 = arith.constant 10 : i32
    %cst_77 = arith.constant dense<0xFF800000> : vector<8xf32>
    %275 = vector.multi_reduction <maximumf>, %274, %cst_77 [1] : vector<8x128xf32> to vector<8xf32>
    %276 = vector.shape_cast %275 : vector<8xf32> to vector<8x1xf32>
    %277 = vector.broadcast %276 : vector<8x1xf32> to vector<8x128xf32>
    %278 = arith.cmpf oeq, %274, %277 : vector<8x128xf32>
    %c128_i32_78 = arith.constant 128 : i32
    %279 = vector.shape_cast %103 : vector<1x128xi32> to vector<1x128xi32>
    %280 = vector.broadcast %279 : vector<1x128xi32> to vector<8x128xi32>
    %281 = vector.broadcast %c128_i32_78 : i32 to vector<8x128xi32>
    %282 = arith.select %278, %280, %281 : vector<8x128xi1>, vector<8x128xi32>
    %cst_79 = arith.constant dense<2147483647> : vector<8xi32>
    %283 = vector.multi_reduction <minsi>, %282, %cst_79 [1] : vector<8x128xi32> to vector<8xi32>
    %284 = vector.shape_cast %283 : vector<8xi32> to vector<8x1xi32>
    %285 = vector.broadcast %103 : vector<1x128xi32> to vector<8x128xi32>
    %286 = vector.broadcast %284 : vector<8x1xi32> to vector<8x128xi32>
    %287 = arith.cmpi eq, %285, %286 : vector<8x128xi32>
    %cst_80 = arith.constant 1.000000e+00 : f32
    %288 = vector.broadcast %cst_80 : f32 to vector<8x128xf32>
    %289 = arith.select %287, %288, %272 : vector<8x128xi1>, vector<8x128xf32>
    %cst_81 = arith.constant -3.40282347E+38 : f32
    %290 = vector.broadcast %cst_81 : f32 to vector<8x128xf32>
    %291 = arith.select %287, %290, %274 : vector<8x128xi1>, vector<8x128xf32>
    %c11_i32 = arith.constant 11 : i32
    %cst_82 = arith.constant dense<0xFF800000> : vector<8xf32>
    %292 = vector.multi_reduction <maximumf>, %291, %cst_82 [1] : vector<8x128xf32> to vector<8xf32>
    %293 = vector.shape_cast %292 : vector<8xf32> to vector<8x1xf32>
    %294 = vector.broadcast %293 : vector<8x1xf32> to vector<8x128xf32>
    %295 = arith.cmpf oeq, %291, %294 : vector<8x128xf32>
    %c128_i32_83 = arith.constant 128 : i32
    %296 = vector.shape_cast %103 : vector<1x128xi32> to vector<1x128xi32>
    %297 = vector.broadcast %296 : vector<1x128xi32> to vector<8x128xi32>
    %298 = vector.broadcast %c128_i32_83 : i32 to vector<8x128xi32>
    %299 = arith.select %295, %297, %298 : vector<8x128xi1>, vector<8x128xi32>
    %cst_84 = arith.constant dense<2147483647> : vector<8xi32>
    %300 = vector.multi_reduction <minsi>, %299, %cst_84 [1] : vector<8x128xi32> to vector<8xi32>
    %301 = vector.shape_cast %300 : vector<8xi32> to vector<8x1xi32>
    %302 = vector.broadcast %103 : vector<1x128xi32> to vector<8x128xi32>
    %303 = vector.broadcast %301 : vector<8x1xi32> to vector<8x128xi32>
    %304 = arith.cmpi eq, %302, %303 : vector<8x128xi32>
    %cst_85 = arith.constant 1.000000e+00 : f32
    %305 = vector.broadcast %cst_85 : f32 to vector<8x128xf32>
    %306 = arith.select %304, %305, %289 : vector<8x128xi1>, vector<8x128xf32>
    %cst_86 = arith.constant -3.40282347E+38 : f32
    %307 = vector.broadcast %cst_86 : f32 to vector<8x128xf32>
    %308 = arith.select %304, %307, %291 : vector<8x128xi1>, vector<8x128xf32>
    %c12_i32 = arith.constant 12 : i32
    %cst_87 = arith.constant dense<0xFF800000> : vector<8xf32>
    %309 = vector.multi_reduction <maximumf>, %308, %cst_87 [1] : vector<8x128xf32> to vector<8xf32>
    %310 = vector.shape_cast %309 : vector<8xf32> to vector<8x1xf32>
    %311 = vector.broadcast %310 : vector<8x1xf32> to vector<8x128xf32>
    %312 = arith.cmpf oeq, %308, %311 : vector<8x128xf32>
    %c128_i32_88 = arith.constant 128 : i32
    %313 = vector.shape_cast %103 : vector<1x128xi32> to vector<1x128xi32>
    %314 = vector.broadcast %313 : vector<1x128xi32> to vector<8x128xi32>
    %315 = vector.broadcast %c128_i32_88 : i32 to vector<8x128xi32>
    %316 = arith.select %312, %314, %315 : vector<8x128xi1>, vector<8x128xi32>
    %cst_89 = arith.constant dense<2147483647> : vector<8xi32>
    %317 = vector.multi_reduction <minsi>, %316, %cst_89 [1] : vector<8x128xi32> to vector<8xi32>
    %318 = vector.shape_cast %317 : vector<8xi32> to vector<8x1xi32>
    %319 = vector.broadcast %103 : vector<1x128xi32> to vector<8x128xi32>
    %320 = vector.broadcast %318 : vector<8x1xi32> to vector<8x128xi32>
    %321 = arith.cmpi eq, %319, %320 : vector<8x128xi32>
    %cst_90 = arith.constant 1.000000e+00 : f32
    %322 = vector.broadcast %cst_90 : f32 to vector<8x128xf32>
    %323 = arith.select %321, %322, %306 : vector<8x128xi1>, vector<8x128xf32>
    %cst_91 = arith.constant -3.40282347E+38 : f32
    %324 = vector.broadcast %cst_91 : f32 to vector<8x128xf32>
    %325 = arith.select %321, %324, %308 : vector<8x128xi1>, vector<8x128xf32>
    %326 = arith.mulf %323, %101 : vector<8x128xf32>
    %327 = vector.broadcast %6 : vector<8x1xf32> to vector<8x128xf32>
    %328 = arith.mulf %326, %327 : vector<8x128xf32>
    %cst_92 = arith.constant dense<0.000000e+00> : vector<128xf32>
    %329 = vector.multi_reduction <add>, %328, %cst_92 [0] : vector<8x128xf32> to vector<128xf32>
    %330 = vector.shape_cast %329 : vector<128xf32> to vector<1x128xf32>
    %331 = tpu.iota {dimensions = array<i32: 0>} : vector<8x1xi32>
    %cst_93 = arith.constant dense<0xFF800000> : vector<128xf32>
    %332 = vector.multi_reduction <maximumf>, %76, %cst_93 [0] : vector<8x128xf32> to vector<128xf32>
    %333 = vector.shape_cast %332 : vector<128xf32> to vector<1x128xf32>
    %334 = vector.broadcast %333 : vector<1x128xf32> to vector<8x128xf32>
    %335 = arith.cmpf oeq, %76, %334 : vector<8x128xf32>
    %c8_i32_94 = arith.constant 8 : i32
    %336 = vector.shape_cast %331 : vector<8x1xi32> to vector<8x1xi32>
    %337 = vector.broadcast %336 : vector<8x1xi32> to vector<8x128xi32>
    %338 = vector.broadcast %c8_i32_94 : i32 to vector<8x128xi32>
    %339 = arith.select %335, %337, %338 : vector<8x128xi1>, vector<8x128xi32>
    %cst_95 = arith.constant dense<2147483647> : vector<128xi32>
    %340 = vector.multi_reduction <minsi>, %339, %cst_95 [0] : vector<8x128xi32> to vector<128xi32>
    %341 = vector.shape_cast %340 : vector<128xi32> to vector<1x128xi32>
    %342 = vector.broadcast %331 : vector<8x1xi32> to vector<8x128xi32>
    %343 = vector.broadcast %341 : vector<1x128xi32> to vector<8x128xi32>
    %344 = arith.cmpi eq, %342, %343 : vector<8x128xi32>
    %345 = arith.extui %344 : vector<8x128xi1> to vector<8x128xi32>
    %346 = arith.sitofp %345 : vector<8x128xi32> to vector<8x128xf32>
    %cst_96 = arith.constant 1.000000e+00 : f32
    %347 = vector.broadcast %cst_96 : f32 to vector<1x128xf32>
    %348 = arith.cmpf ogt, %330, %347 : vector<1x128xf32>
    %349 = vector.shape_cast %348 : vector<1x128xi1> to vector<1x128xi1>
    %350 = vector.broadcast %349 : vector<1x128xi1> to vector<8x128xi1>
    %351 = arith.select %350, %346, %328 : vector<8x128xi1>, vector<8x128xf32>
    %cst_97 = arith.constant dense<0.000000e+00> : vector<128xf32>
    %352 = vector.multi_reduction <add>, %351, %cst_97 [0] : vector<8x128xf32> to vector<128xf32>
    %353 = vector.shape_cast %352 : vector<128xf32> to vector<1x128xf32>
    %cst_98 = arith.constant dense<0xFF800000> : vector<128xf32>
    %354 = vector.multi_reduction <maximumf>, %351, %cst_98 [0] : vector<8x128xf32> to vector<128xf32>
    %355 = vector.shape_cast %354 : vector<128xf32> to vector<1x128xf32>
    %356 = vector.broadcast %355 : vector<1x128xf32> to vector<8x128xf32>
    %357 = arith.cmpf oeq, %351, %356 : vector<8x128xf32>
    %c8_i32_99 = arith.constant 8 : i32
    %358 = vector.shape_cast %331 : vector<8x1xi32> to vector<8x1xi32>
    %359 = vector.broadcast %358 : vector<8x1xi32> to vector<8x128xi32>
    %360 = vector.broadcast %c8_i32_99 : i32 to vector<8x128xi32>
    %361 = arith.select %357, %359, %360 : vector<8x128xi1>, vector<8x128xi32>
    %cst_100 = arith.constant dense<2147483647> : vector<128xi32>
    %362 = vector.multi_reduction <minsi>, %361, %cst_100 [0] : vector<8x128xi32> to vector<128xi32>
    %363 = vector.shape_cast %362 : vector<128xi32> to vector<1x128xi32>
    %364 = vector.broadcast %331 : vector<8x1xi32> to vector<8x128xi32>
    %365 = vector.broadcast %363 : vector<1x128xi32> to vector<8x128xi32>
    %366 = arith.cmpi eq, %364, %365 : vector<8x128xi32>
    %367 = arith.extui %366 : vector<8x128xi1> to vector<8x128xi32>
    %368 = arith.sitofp %367 : vector<8x128xi32> to vector<8x128xf32>
    %c0_i32_101 = arith.constant 0 : i32
    %369 = vector.shape_cast %28 : vector<8x1xi32> to vector<8x1xi32>
    %370 = vector.broadcast %369 : vector<8x1xi32> to vector<8x128xi32>
    %371 = vector.broadcast %c0_i32_101 : i32 to vector<8x128xi32>
    %372 = arith.select %366, %370, %371 : vector<8x128xi1>, vector<8x128xi32>
    %cst_102 = arith.constant dense<0> : vector<128xi32>
    %373 = vector.multi_reduction <add>, %372, %cst_102 [0] : vector<8x128xi32> to vector<128xi32>
    %374 = vector.shape_cast %373 : vector<128xi32> to vector<1x128xi32>
    %c0_103 = arith.constant 0 : index
    %c0_104 = arith.constant 0 : index
    %c0_105 = arith.constant 0 : index
    %375 = vector.load %arg7[%c0_103, %c0_104, %c0_105] : memref<1x1x128xi32, #tpu.memory_space<vmem>>, vector<1x1x128xi32>
    %376 = vector.shape_cast %375 : vector<1x1x128xi32> to vector<1x128xi32>
    %377 = vector.shape_cast %374 : vector<1x128xi32> to vector<1x1x128xi32>
    tpu.vector_store %arg7[%c0_103, %c0_104, %c0_105], %377 {strides = array<i32>} : memref<1x1x128xi32, #tpu.memory_space<vmem>>, vector<1x1x128xi32>,
    %378 = vector.broadcast %29 : vector<8x1xf32> to vector<8x128xf32>
    %379 = arith.mulf %368, %378 : vector<8x128xf32>
    %cst_106 = arith.constant dense<0.000000e+00> : vector<128xf32>
    %380 = vector.multi_reduction <add>, %379, %cst_106 [0] : vector<8x128xf32> to vector<128xf32>
    %381 = vector.shape_cast %380 : vector<128xf32> to vector<1x128xf32>
    %382 = vector.broadcast %30 : vector<8x1xf32> to vector<8x128xf32>
    %383 = arith.mulf %368, %382 : vector<8x128xf32>
    %cst_107 = arith.constant dense<0.000000e+00> : vector<128xf32>
    %384 = vector.multi_reduction <add>, %383, %cst_107 [0] : vector<8x128xf32> to vector<128xf32>
    %385 = vector.shape_cast %384 : vector<128xf32> to vector<1x128xf32>
    %386 = vector.broadcast %31 : vector<8x1xf32> to vector<8x128xf32>
    %387 = arith.mulf %368, %386 : vector<8x128xf32>
    %cst_108 = arith.constant dense<0.000000e+00> : vector<128xf32>
    %388 = vector.multi_reduction <add>, %387, %cst_108 [0] : vector<8x128xf32> to vector<128xf32>
    %389 = vector.shape_cast %388 : vector<128xf32> to vector<1x128xf32>
    %390 = vector.broadcast %32 : vector<8x1xf32> to vector<8x128xf32>
    %391 = arith.mulf %368, %390 : vector<8x128xf32>
    %cst_109 = arith.constant dense<0.000000e+00> : vector<128xf32>
    %392 = vector.multi_reduction <add>, %391, %cst_109 [0] : vector<8x128xf32> to vector<128xf32>
    %393 = vector.shape_cast %392 : vector<128xf32> to vector<1x128xf32>
    %394 = tpu.concatenate %381, %385, %389, %393 in 0 : vector<1x128xf32>, vector<1x128xf32>, vector<1x128xf32>, vector<1x128xf32> -> vector<4x128xf32>
    %c0_110 = arith.constant 0 : index
    %c0_111 = arith.constant 0 : index
    %c0_112 = arith.constant 0 : index
    %395 = vector.load %arg8[%c0_110, %c0_111, %c0_112] : memref<1x4x128xf32, #tpu.memory_space<vmem>>, vector<1x4x128xf32>
    %396 = vector.shape_cast %395 : vector<1x4x128xf32> to vector<4x128xf32>
    %397 = vector.shape_cast %394 : vector<4x128xf32> to vector<1x4x128xf32>
    tpu.vector_store %arg8[%c0_110, %c0_111, %c0_112], %397 {strides = array<i32>} : memref<1x4x128xf32, #tpu.memory_space<vmem>>, vector<1x4x128xf32>,
    %398 = arith.mulf %80, %351 : vector<8x128xf32>
    %cst_113 = arith.constant dense<0xFF800000> : vector<8xf32>
    %399 = vector.multi_reduction <maximumf>, %398, %cst_113 [1] : vector<8x128xf32> to vector<8xf32>
    %400 = vector.shape_cast %399 : vector<8xf32> to vector<8x1xf32>
    %401 = arith.mulf %76, %351 : vector<8x128xf32>
    %cst_114 = arith.constant dense<0xFF800000> : vector<8xf32>
    %402 = vector.multi_reduction <maximumf>, %401, %cst_114 [1] : vector<8x128xf32> to vector<8xf32>
    %403 = vector.shape_cast %402 : vector<8xf32> to vector<8x1xf32>
    %cst_115 = arith.constant 9.99999971E-10 : f32
    %404 = vector.broadcast %cst_115 : f32 to vector<8x1xf32>
    %405 = arith.addf %400, %404 : vector<8x1xf32>
    %406 = arith.divf %403, %405 : vector<8x1xf32>
    %407 = vector.broadcast %406 : vector<8x1xf32> to vector<8x128xf32>
    %408 = arith.mulf %398, %407 : vector<8x128xf32>
    %cst_116 = arith.constant dense<0xFF800000> : vector<128xf32>
    %409 = vector.multi_reduction <maximumf>, %408, %cst_116 [0] : vector<8x128xf32> to vector<128xf32>
    %410 = vector.shape_cast %409 : vector<128xf32> to vector<1x128xf32>
    %cst_117 = arith.constant 0.000000e+00 : f32
    %411 = vector.broadcast %cst_117 : f32 to vector<1x128xf32>
    %412 = arith.cmpf ogt, %353, %411 : vector<1x128xf32>
    %cst_118 = arith.constant 0.000000e+00 : f32
    %413 = vector.broadcast %cst_118 : f32 to vector<1x128xf32>
    %414 = arith.select %412, %410, %413 : vector<1x128xi1>, vector<1x128xf32>
    %c0_119 = arith.constant 0 : index
    %c0_120 = arith.constant 0 : index
    %c0_121 = arith.constant 0 : index
    %415 = vector.load %arg9[%c0_119, %c0_120, %c0_121] : memref<1x1x128xf32, #tpu.memory_space<vmem>>, vector<1x1x128xf32>
    %416 = vector.shape_cast %415 : vector<1x1x128xf32> to vector<1x128xf32>
    %417 = vector.shape_cast %414 : vector<1x128xf32> to vector<1x1x128xf32>
    tpu.vector_store %arg9[%c0_119, %c0_120, %c0_121], %417 {strides = array<i32>} : memref<1x1x128xf32, #tpu.memory_space<vmem>>, vector<1x1x128xf32>,
    %c0_122 = arith.constant 0 : index
    %c0_123 = arith.constant 0 : index
    %c0_124 = arith.constant 0 : index
    %418 = vector.load %arg10[%c0_122, %c0_123, %c0_124] : memref<1x1x128xf32, #tpu.memory_space<vmem>>, vector<1x1x128xf32>
    %419 = vector.shape_cast %418 : vector<1x1x128xf32> to vector<1x128xf32>
    %420 = vector.shape_cast %353 : vector<1x128xf32> to vector<1x1x128xf32>
    tpu.vector_store %arg10[%c0_122, %c0_123, %c0_124], %420 {strides = array<i32>} : memref<1x1x128xf32, #tpu.memory_space<vmem>>, vector<1x1x128xf32>,
    return
  }
  func.func @transform_0(%arg0: i32) -> (i32, i32, i32) {
    %c0_i32 = arith.constant 0 : i32
    %c0_i32_0 = arith.constant 0 : i32
    %c0_i32_1 = arith.constant 0 : i32
    return %arg0, %c0_i32, %c0_i32_0 : i32, i32, i32
  }
  func.func @transform_1(%arg0: i32) -> (i32, i32, i32) {
    %c0_i32 = arith.constant 0 : i32
    %c0_i32_0 = arith.constant 0 : i32
    %c0_i32_1 = arith.constant 0 : i32
    return %arg0, %c0_i32, %c0_i32_0 : i32, i32, i32
  }
  func.func @transform_2(%arg0: i32) -> (i32, i32) {
    %c0_i32 = arith.constant 0 : i32
    %c0_i32_0 = arith.constant 0 : i32
    %c0_i32_1 = arith.constant 0 : i32
    return %c0_i32, %c0_i32_0 : i32, i32
  }
  func.func @transform_3(%arg0: i32) -> (i32, i32, i32) {
    %c0_i32 = arith.constant 0 : i32
    %c0_i32_0 = arith.constant 0 : i32
    %c0_i32_1 = arith.constant 0 : i32
    return %arg0, %c0_i32, %c0_i32_0 : i32, i32, i32
  }
  func.func @transform_4(%arg0: i32) -> (i32, i32, i32) {
    %c0_i32 = arith.constant 0 : i32
    %c0_i32_0 = arith.constant 0 : i32
    %c0_i32_1 = arith.constant 0 : i32
    return %arg0, %c0_i32, %c0_i32_0 : i32, i32, i32
  }
  func.func @transform_5(%arg0: i32) -> (i32, i32, i32) {
    %c0_i32 = arith.constant 0 : i32
    %c0_i32_0 = arith.constant 0 : i32
    %c0_i32_1 = arith.constant 0 : i32
    return %arg0, %c0_i32, %c0_i32_0 : i32, i32, i32
  }
  func.func @transform_6(%arg0: i32) -> (i32, i32, i32) {
    %c0_i32 = arith.constant 0 : i32
    %c0_i32_0 = arith.constant 0 : i32
    %c0_i32_1 = arith.constant 0 : i32
    return %arg0, %c0_i32, %c0_i32_0 : i32, i32, i32
  }
  func.func @transform_7(%arg0: i32) -> (i32, i32, i32) {
    %c0_i32 = arith.constant 0 : i32
    %c0_i32_0 = arith.constant 0 : i32
    %c0_i32_1 = arith.constant 0 : i32
    return %arg0, %c0_i32, %c0_i32_0 : i32, i32, i32
  }
  func.func @transform_8(%arg0: i32) -> (i32, i32, i32) {
    %c0_i32 = arith.constant 0 : i32
    %c0_i32_0 = arith.constant 0 : i32
    %c0_i32_1 = arith.constant 0 : i32
    return %arg0, %c0_i32, %c0_i32_0 : i32, i32, i32
  }
  func.func @transform_9(%arg0: i32) -> (i32, i32, i32) {
    %c0_i32 = arith.constant 0 : i32
    %c0_i32_0 = arith.constant 0 : i32
    %c0_i32_1 = arith.constant 0 : i32
    return %arg0, %c0_i32, %c0_i32_0 : i32, i32, i32
  }
}

</mosaic_0001>

<llo_original>
// kernel: tpu_custom_call.1
$region0: #{tpu_custom_call.1}
  #allocation0 [shape = 'u32[]', space=smem, size = 0x4, offset = 0x4, fixed_abs, tag = 'smem constant byte address 0x4 - core index']
  #allocation1 [shape = 'u32[144,128]{1,0:T(1,128)}', space=vmem, size = 0x12000, scoped, tag = 'internal scratch']
  %s0 = inlined_call_operand.hbm [shape: f32[2,80,128], index: 0, kind: input, shape index: {}]
  %s1 = inlined_call_operand.vmem [shape: f32[2,4,128], index: 1, kind: input, shape index: {}]
  %s2 = inlined_call_operand.vmem [shape: f32[2,128], index: 2, kind: input, shape index: {}]
  %s3 = inlined_call_operand.vmem [shape: s32[2,8,1], index: 3, kind: input, shape index: {}]
  %s4 = inlined_call_operand.vmem [shape: f32[2,8,4], index: 4, kind: input, shape index: {}]
  %s5 = inlined_call_operand.vmem [shape: f32[2,8,1], index: 5, kind: input, shape index: {}]
  %s6 = inlined_call_operand.hbm [shape: s32[2,1,128], index: 6, kind: output, shape index: {0}]
  %s7 = inlined_call_operand.hbm [shape: f32[2,4,128], index: 7, kind: output, shape index: {1}]
  %s8 = inlined_call_operand.hbm [shape: f32[2,1,128], index: 8, kind: output, shape index: {2}]
  %s9 = inlined_call_operand.hbm [shape: f32[2,1,128], index: 9, kind: output, shape index: {3}]
  %10 = xla_tuple %s6, %s7, %s8, %s9
  %s11 = sld [smem:[#allocation0]]
  $region85: #{tpu_custom_call.1} parent=0
    _
  %s13 = ssub.s32 1, %s11
  %s14 = scalar_select 0, %s13, %s11
  $region1: #{tpu_custom_call.1} parent=0
    #allocation2 [shape = 'u8[81920]{0}', space=vmem, size = 0x14000, scoped, tag = 'input window, operand 0']
    #allocation3 [shape = 's32[2]{0}', space=sflag, size = 0x8, scoped, tag = 'scoped memory for tpu_custom_call.1']
    #allocation4 [shape = 's32[2]{0}', space=sflag, size = 0x8, scoped, tag = 'scoped memory for tpu_custom_call.1']
    #allocation5 [shape = 'u8[1024]{0}', space=vmem, size = 0x400, scoped, tag = 'output window, operand 0']
    #allocation6 [shape = 'u8[4096]{0}', space=vmem, size = 0x1000, scoped, tag = 'output window, operand 1']
    #allocation7 [shape = 's32[2]{0}', space=sflag, size = 0x8, scoped, tag = 'scoped memory for tpu_custom_call.1']
    #allocation8 [shape = 'u8[1024]{0}', space=vmem, size = 0x400, scoped, tag = 'output window, operand 2']
    #allocation9 [shape = 'u8[1024]{0}', space=vmem, size = 0x400, scoped, tag = 'output window, operand 3']
    #allocation10 [shape = 's32[2]{0}', space=sflag, size = 0x8, scoped, tag = 'scoped memory for tpu_custom_call.1']
    %15 = vsyncpa [#allocation3], 0
    %s16 = scalar_lea.sflag [#allocation3], 1
    %17 = vsyncpa %s16, 0
    %18 = vsyncpa [#allocation4], 0
    %s19 = scalar_lea.sflag [#allocation4], 1
    %20 = vsyncpa %s19, 0
    %21 = vsyncpa [#allocation7], 0
    %s22 = scalar_lea.sflag [#allocation7], 1
    %23 = vsyncpa %s22, 0
    %24 = vsyncpa [#allocation10], 0
    %s25 = scalar_lea.sflag [#allocation10], 1
    %26 = vsyncpa %s25, 0
    loop: start=0, step=1, limit=4
    $region2: #{tpu_custom_call.1} parent=1 // loop_pre_header
      _
    $region3: #{tpu_custom_call.1} parent=1 // loop_header
      %s28 = sphi 0, %s32
      %p29 = scmp.ge.s32.totalorder %s28, 4
      %s38 = sphi 0, %s40
      %s41 = sphi 0, %s38
      %s42 = sphi 0, %s41
      %s58 = sphi 0, %s42
      %s64 = sphi 0, %s66
      %s67 = sphi 0, %s64
      %s68 = sphi 0, %s67
      %s84 = sphi 0, %s68
      %s88 = sphi 0, %s88
      %s90 = sphi 0, %s88
      %s91 = sphi 0, %s90
      %s105 = sphi 0, %s91
      %s111 = sphi 0, %s113
      %s114 = sphi 0, %s111
      %s115 = sphi 0, %s114
      %s131 = sphi 0, %s115
      %s137 = sphi 0, %s139
      %s140 = sphi 0, %s137
      %s141 = sphi 0, %s140
      %s157 = sphi 0, %s141
      %s163 = sphi 0, %s165
      %s166 = sphi 0, %s163
      %s167 = sphi 0, %s166
      %s183 = sphi 0, %s167
      %s189 = sphi 0, %s191
      %s192 = sphi 0, %s189
      %s193 = sphi 0, %s192
      %s209 = sphi 0, %s193
      %s215 = sphi 0, %s217
      %s218 = sphi 0, %s215
      %s219 = sphi 0, %s218
      %s235 = sphi 0, %s219
      %s241 = sphi 0, %s243
      %s244 = sphi 0, %s241
      %s245 = sphi 0, %s244
      %s261 = sphi 0, %s245
      %s267 = sphi 0, %s269
      %s270 = sphi 0, %s267
      %s271 = sphi 0, %s270
      %s287 = sphi 0, %s271
    $region4: #{tpu_custom_call.1} parent=1 // loop_header_branch
      %31 = sbr.rel (%p29) target = $region8
    $region5: #{tpu_custom_call.1} parent=1 // loop_body
      %s33 = ssub.s32 %s28, 1
      %s34 = ssub.s32 %s28, 2
      %s35 = sadd.s32 %s28, 1
      %s36 = ssub.s32 %s28, %s35
      %p37 = scmp.eq.s32.totalorder %s36, 0
      %s39 = sadd.s32 %s38, 1
      %s40 = scalar_select %p37, %s38, %s39
      %p43 = pneg %p37
      %p44 = scmp.eq.s32.totalorder %s28, 1
      %p45 = por %p43, %p44
      %p46 = scmp.ne.s32.totalorder %s38, %s41
      %p47 = scmp.eq.s32.totalorder %s28, 0
      %p48 = por %p46, %p47
      %p49 = scmp.ne.s32.totalorder %s38, %s41
      %p50 = scmp.eq.s32.totalorder %s33, 1
      %p51 = por %p49, %p50
      %p52 = scmp.ne.s32.totalorder %s41, %s42
      %p53 = scmp.eq.s32.totalorder %s33, 0
      %p54 = por %p52, %p53
      %p55 = scmp.ne.s32.totalorder %s41, %s42
      %p56 = scmp.eq.s32.totalorder %s34, 1
      %p57 = por %p55, %p56
      %p59 = scmp.ne.s32.totalorder %s42, %s58
      %p60 = scmp.eq.s32.totalorder %s34, 0
      %p61 = por %p59, %p60
      %s62 = ssub.s32 %s28, %s35
      %p63 = scmp.eq.s32.totalorder %s62, 0
      %s65 = sadd.s32 %s64, 1
      %s66 = scalar_select %p63, %s64, %s65
      %p69 = pneg %p63
      %p70 = scmp.eq.s32.totalorder %s28, 1
      %p71 = por %p69, %p70
      %p72 = scmp.ne.s32.totalorder %s64, %s67
      %p73 = scmp.eq.s32.totalorder %s28, 0
      %p74 = por %p72, %p73
      %p75 = scmp.ne.s32.totalorder %s64, %s67
      %p76 = scmp.eq.s32.totalorder %s33, 1
      %p77 = por %p75, %p76
      %p78 = scmp.ne.s32.totalorder %s67, %s68
      %p79 = scmp.eq.s32.totalorder %s33, 0
      %p80 = por %p78, %p79
      %p81 = scmp.ne.s32.totalorder %s67, %s68
      %p82 = scmp.eq.s32.totalorder %s34, 1
      %p83 = por %p81, %p82
      %p85 = scmp.ne.s32.totalorder %s68, %s84
      %p86 = scmp.eq.s32.totalorder %s34, 0
      %p87 = por %p85, %p86
      %s89 = sadd.s32 %s88, 1
      %p92 = scmp.eq.s32.totalorder %s28, 1
      %p93 = scmp.ne.s32.totalorder %s88, %s90
      %p94 = scmp.eq.s32.totalorder %s28, 0
      %p95 = por %p93, %p94
      %p96 = scmp.ne.s32.totalorder %s88, %s90
      %p97 = scmp.eq.s32.totalorder %s33, 1
      %p98 = por %p96, %p97
      %p99 = scmp.ne.s32.totalorder %s90, %s91
      %p100 = scmp.eq.s32.totalorder %s33, 0
      %p101 = por %p99, %p100
      %p102 = scmp.ne.s32.totalorder %s90, %s91
      %p103 = scmp.eq.s32.totalorder %s34, 1
      %p104 = por %p102, %p103
      %p106 = scmp.ne.s32.totalorder %s91, %s105
      %p107 = scmp.eq.s32.totalorder %s34, 0
      %p108 = por %p106, %p107
      %s109 = ssub.s32 %s28, %s35
      %p110 = scmp.eq.s32.totalorder %s109, 0
      %s112 = sadd.s32 %s111, 1
      %s113 = scalar_select %p110, %s111, %s112
      %p116 = pneg %p110
      %p117 = scmp.eq.s32.totalorder %s28, 1
      %p118 = por %p116, %p117
      %p119 = scmp.ne.s32.totalorder %s111, %s114
      %p120 = scmp.eq.s32.totalorder %s28, 0
      %p121 = por %p119, %p120
      %p122 = scmp.ne.s32.totalorder %s111, %s114
      %p123 = scmp.eq.s32.totalorder %s33, 1
      %p124 = por %p122, %p123
      %p125 = scmp.ne.s32.totalorder %s114, %s115
      %p126 = scmp.eq.s32.totalorder %s33, 0
      %p127 = por %p125, %p126
      %p128 = scmp.ne.s32.totalorder %s114, %s115
      %p129 = scmp.eq.s32.totalorder %s34, 1
      %p130 = por %p128, %p129
      %p132 = scmp.ne.s32.totalorder %s115, %s131
      %p133 = scmp.eq.s32.totalorder %s34, 0
      %p134 = por %p132, %p133
      %s135 = ssub.s32 %s28, %s35
      %p136 = scmp.eq.s32.totalorder %s135, 0
      %s138 = sadd.s32 %s137, 1
      %s139 = scalar_select %p136, %s137, %s138
      %p142 = pneg %p136
      %p143 = scmp.eq.s32.totalorder %s28, 1
      %p144 = por %p142, %p143
      %p145 = scmp.ne.s32.totalorder %s137, %s140
      %p146 = scmp.eq.s32.totalorder %s28, 0
      %p147 = por %p145, %p146
      %p148 = scmp.ne.s32.totalorder %s137, %s140
      %p149 = scmp.eq.s32.totalorder %s33, 1
      %p150 = por %p148, %p149
      %p151 = scmp.ne.s32.totalorder %s140, %s141
      %p152 = scmp.eq.s32.totalorder %s33, 0
      %p153 = por %p151, %p152
      %p154 = scmp.ne.s32.totalorder %s140, %s141
      %p155 = scmp.eq.s32.totalorder %s34, 1
      %p156 = por %p154, %p155
      %p158 = scmp.ne.s32.totalorder %s141, %s157
      %p159 = scmp.eq.s32.totalorder %s34, 0
      %p160 = por %p158, %p159
      %s161 = ssub.s32 %s28, %s35
      %p162 = scmp.eq.s32.totalorder %s161, 0
      %s164 = sadd.s32 %s163, 1
      %s165 = scalar_select %p162, %s163, %s164
      %p168 = pneg %p162
      %p169 = scmp.eq.s32.totalorder %s28, 1
      %p170 = por %p168, %p169
      %p171 = scmp.ne.s32.totalorder %s163, %s166
      %p172 = scmp.eq.s32.totalorder %s28, 0
      %p173 = por %p171, %p172
      %p174 = scmp.ne.s32.totalorder %s163, %s166
      %p175 = scmp.eq.s32.totalorder %s33, 1
      %p176 = por %p174, %p175
      %p177 = scmp.ne.s32.totalorder %s166, %s167
      %p178 = scmp.eq.s32.totalorder %s33, 0
      %p179 = por %p177, %p178
      %p180 = scmp.ne.s32.totalorder %s166, %s167
      %p181 = scmp.eq.s32.totalorder %s34, 1
      %p182 = por %p180, %p181
      %p184 = scmp.ne.s32.totalorder %s167, %s183
      %p185 = scmp.eq.s32.totalorder %s34, 0
      %p186 = por %p184, %p185
      %s187 = ssub.s32 %s28, %s35
      %p188 = scmp.eq.s32.totalorder %s187, 0
      %s190 = sadd.s32 %s189, 1
      %s191 = scalar_select %p188, %s189, %s190
      %p194 = pneg %p188
      %p195 = scmp.eq.s32.totalorder %s28, 1
      %p196 = por %p194, %p195
      %p197 = scmp.ne.s32.totalorder %s189, %s192
      %p198 = scmp.eq.s32.totalorder %s28, 0
      %p199 = por %p197, %p198
      %p200 = scmp.ne.s32.totalorder %s189, %s192
      %p201 = scmp.eq.s32.totalorder %s33, 1
      %p202 = por %p200, %p201
      %p203 = scmp.ne.s32.totalorder %s192, %s193
      %p204 = scmp.eq.s32.totalorder %s33, 0
      %p205 = por %p203, %p204
      %p206 = scmp.ne.s32.totalorder %s192, %s193
      %p207 = scmp.eq.s32.totalorder %s34, 1
      %p208 = por %p206, %p207
      %p210 = scmp.ne.s32.totalorder %s193, %s209
      %p211 = scmp.eq.s32.totalorder %s34, 0
      %p212 = por %p210, %p211
      %s213 = ssub.s32 %s28, %s35
      %p214 = scmp.eq.s32.totalorder %s213, 0
      %s216 = sadd.s32 %s215, 1
      %s217 = scalar_select %p214, %s215, %s216
      %p220 = pneg %p214
      %p221 = scmp.eq.s32.totalorder %s28, 1
      %p222 = por %p220, %p221
      %p223 = scmp.ne.s32.totalorder %s215, %s218
      %p224 = scmp.eq.s32.totalorder %s28, 0
      %p225 = por %p223, %p224
      %p226 = scmp.ne.s32.totalorder %s215, %s218
      %p227 = scmp.eq.s32.totalorder %s33, 1
      %p228 = por %p226, %p227
      %p229 = scmp.ne.s32.totalorder %s218, %s219
      %p230 = scmp.eq.s32.totalorder %s33, 0
      %p231 = por %p229, %p230
      %p232 = scmp.ne.s32.totalorder %s218, %s219
      %p233 = scmp.eq.s32.totalorder %s34, 1
      %p234 = por %p232, %p233
      %p236 = scmp.ne.s32.totalorder %s219, %s235
      %p237 = scmp.eq.s32.totalorder %s34, 0
      %p238 = por %p236, %p237
      %s239 = ssub.s32 %s28, %s35
      %p240 = scmp.eq.s32.totalorder %s239, 0
      %s242 = sadd.s32 %s241, 1
      %s243 = scalar_select %p240, %s241, %s242
      %p246 = pneg %p240
      %p247 = scmp.eq.s32.totalorder %s28, 1
      %p248 = por %p246, %p247
      %p249 = scmp.ne.s32.totalorder %s241, %s244
      %p250 = scmp.eq.s32.totalorder %s28, 0
      %p251 = por %p249, %p250
      %p252 = scmp.ne.s32.totalorder %s241, %s244
      %p253 = scmp.eq.s32.totalorder %s33, 1
      %p254 = por %p252, %p253
      %p255 = scmp.ne.s32.totalorder %s244, %s245
      %p256 = scmp.eq.s32.totalorder %s33, 0
      %p257 = por %p255, %p256
      %p258 = scmp.ne.s32.totalorder %s244, %s245
      %p259 = scmp.eq.s32.totalorder %s34, 1
      %p260 = por %p258, %p259
      %p262 = scmp.ne.s32.totalorder %s245, %s261
      %p263 = scmp.eq.s32.totalorder %s34, 0
      %p264 = por %p262, %p263
      %s265 = ssub.s32 %s28, %s35
      %p266 = scmp.eq.s32.totalorder %s265, 0
      %s268 = sadd.s32 %s267, 1
      %s269 = scalar_select %p266, %s267, %s268
      %p272 = pneg %p266
      %p273 = scmp.eq.s32.totalorder %s28, 1
      %p274 = por %p272, %p273
      %p275 = scmp.ne.s32.totalorder %s267, %s270
      %p276 = scmp.eq.s32.totalorder %s28, 0
      %p277 = por %p275, %p276
      %p278 = scmp.ne.s32.totalorder %s267, %s270
      %p279 = scmp.eq.s32.totalorder %s33, 1
      %p280 = por %p278, %p279
      %p281 = scmp.ne.s32.totalorder %s270, %s271
      %p282 = scmp.eq.s32.totalorder %s33, 0
      %p283 = por %p281, %p282
      %p284 = scmp.ne.s32.totalorder %s270, %s271
      %p285 = scmp.eq.s32.totalorder %s34, 1
      %p286 = por %p284, %p285
      %p288 = scmp.ne.s32.totalorder %s271, %s287
      %p289 = scmp.eq.s32.totalorder %s34, 0
      %p290 = por %p288, %p289
      %p291 = scmp.le.s32.totalorder 1, %s28
      %p292 = scmp.lt.s32.totalorder %s28, 3
      %p293 = pnand %p291, %p292
      %p294 = pneg %p293
      // Predicated region
      $region9: #{tpu_custom_call.1} parent=5 // pred_check
        _
      $region10: #{tpu_custom_call.1} parent=5 // pred_check_branch
        %296 = sbr.rel (%p293) target = $region12
      $region11: #{tpu_custom_call.1} parent=5 // pred_region
        %s297 = ssub.s32 %s28, 1
        // Predicated region
        $region13: #{tpu_custom_call.1} parent=11 // pred_check
          %p298 = pneg %p101
        $region14: #{tpu_custom_call.1} parent=11 // pred_check_branch
          %300 = sbr.rel (%p298) target = $region16
        $region15: #{tpu_custom_call.1} parent=11 // pred_region
          _
        $region16: #{tpu_custom_call.1} parent=11 // pred_fallthru
          _
      $region12: #{tpu_custom_call.1} parent=5 // pred_fallthru
        _
      %p301 = scmp.lt.s32.totalorder %s28, 2
      // Predicated region
      $region17: #{tpu_custom_call.1} parent=5 // pred_check
        %p302 = pneg %p301
      $region18: #{tpu_custom_call.1} parent=5 // pred_check_branch
        %304 = sbr.rel (%p302) target = $region20
      $region19: #{tpu_custom_call.1} parent=5 // pred_region
        // Predicated region
        $region21: #{tpu_custom_call.1} parent=19 // pred_check
          %p305 = pneg %p48
        $region22: #{tpu_custom_call.1} parent=19 // pred_check_branch
          %307 = sbr.rel (%p305) target = $region24
        $region23: #{tpu_custom_call.1} parent=19 // pred_region
          %s308 = sand.u32 %s38, 1
          %s309 = scalar_lea.sflag [#allocation3], %s308
          %s310 = sand.u32 %s38, 1
          %s311 = smul.addr %s310, 80
          %s312 = scalar_lea.vmem [#allocation2], %s311
          %s314 = ssub.s32 1280, 1280
          %315 = vsyncadd %s309, %s314
          %s316 = smul.addr %s28, 10
          %s317 = smul.addr %s316, 128
          %s318 = scalar_lea.hbm %s0, %s317
          %s319 = sshll.u32 %s312, 4
          %s320 = int_to_ptr.vmem [resolvable:$true] %s319
          %325 = dma.hbm_to_vmem [thread:$0]  %s318, 1280, %s320, %s309, 128, 128, 8
        $region24: #{tpu_custom_call.1} parent=19 // pred_fallthru
          _
        // Predicated region
        $region25: #{tpu_custom_call.1} parent=19 // pred_check
          %p326 = pneg %p74
        $region26: #{tpu_custom_call.1} parent=19 // pred_check_branch
          %328 = sbr.rel (%p326) target = $region28
        $region27: #{tpu_custom_call.1} parent=19 // pred_region
          %p329 = scmp.lt.s32.totalorder %s28, 1
          %s330 = scalar_select %p329, %s28, 1
          %s331 = smul.addr %s330, 4
          %s332 = scalar_lea.vmem %s1, %s331
        $region28: #{tpu_custom_call.1} parent=19 // pred_fallthru
          _
        // Predicated region
        $region29: #{tpu_custom_call.1} parent=19 // pred_check
          %p333 = pneg %p121
        $region30: #{tpu_custom_call.1} parent=19 // pred_check_branch
          %335 = sbr.rel (%p333) target = $region32
        $region31: #{tpu_custom_call.1} parent=19 // pred_region
          %p336 = scmp.lt.s32.totalorder %s28, 1
          %s337 = scalar_select %p336, %s28, 1
          %s338 = smul.addr %s337, 8
          %s339 = scalar_lea.vmem %s3, %s338
        $region32: #{tpu_custom_call.1} parent=19 // pred_fallthru
          _
        // Predicated region
        $region33: #{tpu_custom_call.1} parent=19 // pred_check
          %p340 = pneg %p147
        $region34: #{tpu_custom_call.1} parent=19 // pred_check_branch
          %342 = sbr.rel (%p340) target = $region36
        $region35: #{tpu_custom_call.1} parent=19 // pred_region
          %p343 = scmp.lt.s32.totalorder %s28, 1
          %s344 = scalar_select %p343, %s28, 1
          %s345 = smul.addr %s344, 8
          %s346 = scalar_lea.vmem %s4, %s345
        $region36: #{tpu_custom_call.1} parent=19 // pred_fallthru
          _
        // Predicated region
        $region37: #{tpu_custom_call.1} parent=19 // pred_check
          %p347 = pneg %p173
        $region38: #{tpu_custom_call.1} parent=19 // pred_check_branch
          %349 = sbr.rel (%p347) target = $region40
        $region39: #{tpu_custom_call.1} parent=19 // pred_region
          %p350 = scmp.lt.s32.totalorder %s28, 1
          %s351 = scalar_select %p350, %s28, 1
          %s352 = smul.addr %s351, 8
          %s353 = scalar_lea.vmem %s5, %s352
        $region40: #{tpu_custom_call.1} parent=19 // pred_fallthru
          _
      $region20: #{tpu_custom_call.1} parent=5 // pred_fallthru
        _
      %p354 = scmp.le.s32.totalorder 1, %s28
      %p355 = scmp.lt.s32.totalorder %s28, 3
      %p356 = pnand %p354, %p355
      %p357 = pneg %p356
      // Predicated region
      $region41: #{tpu_custom_call.1} parent=5 // pred_check
        _
      $region42: #{tpu_custom_call.1} parent=5 // pred_check_branch
        %359 = sbr.rel (%p356) target = $region44
      $region43: #{tpu_custom_call.1} parent=5 // pred_region
        %s360 = ssub.s32 %s28, 1
        %s361 = sand.u32 %s41, 1
        %s362 = scalar_lea.sflag [#allocation3], %s361
        %s363 = sand.u32 %s41, 1
        %s364 = smul.addr %s363, 80
        %s365 = scalar_lea.vmem [#allocation2], %s364
        // Predicated region
        $region45: #{tpu_custom_call.1} parent=43 // pred_check
          %p366 = pneg %p54
        $region46: #{tpu_custom_call.1} parent=43 // pred_check_branch
          %368 = sbr.rel (%p366) target = $region48
        $region47: #{tpu_custom_call.1} parent=43 // pred_region
          %369 = dma.done %s362, 1280
        $region48: #{tpu_custom_call.1} parent=43 // pred_fallthru
          _
        %s370 = sand.u32 %s41, 1
        %s371 = scalar_lea.sflag [#allocation3], %s370
        %s372 = sand.u32 %s41, 1
        %s373 = smul.addr %s372, 80
        %s374 = scalar_lea.vmem [#allocation2], %s373
        %p375 = pneg %p54
        %p376 = pneg %p51
        %p377 = scmp.lt.s32.totalorder %s33, 1
        %s378 = scalar_select %p377, %s33, 1
        %s379 = smul.addr %s378, 4
        %s380 = scalar_lea.vmem %s1, %s379
        %p381 = pneg %p80
        %p382 = pneg %p77
        %p383 = pneg %p101
        %p384 = pneg %p98
        %p385 = scmp.lt.s32.totalorder %s33, 1
        %s386 = scalar_select %p385, %s33, 1
        %s387 = smul.addr %s386, 8
        %s388 = scalar_lea.vmem %s3, %s387
        %p389 = pneg %p127
        %p390 = pneg %p124
        %p391 = scmp.lt.s32.totalorder %s33, 1
        %s392 = scalar_select %p391, %s33, 1
        %s393 = smul.addr %s392, 8
        %s394 = scalar_lea.vmem %s4, %s393
        %p395 = pneg %p153
        %p396 = pneg %p150
        %p397 = scmp.lt.s32.totalorder %s33, 1
        %s398 = scalar_select %p397, %s33, 1
        %s399 = smul.addr %s398, 8
        %s400 = scalar_lea.vmem %s5, %s399
        %p401 = pneg %p179
        %p402 = pneg %p176
        %p403 = pneg %p205
        %p404 = pneg %p202
        %s405 = sand.u32 %s192, 1
        %s406 = scalar_lea.sflag [#allocation4], %s405
        %s407 = sand.u32 %s192, 1
        %s408 = scalar_lea.vmem [#allocation5], %s407
        %p409 = pneg %p231
        %p410 = pneg %p228
        %s411 = sand.u32 %s33, 1
        %s412 = scalar_lea.sflag [#allocation7], %s411
        %s413 = sand.u32 %s218, 1
        %s414 = smul.addr %s413, 4
        %s415 = scalar_lea.vmem [#allocation6], %s414
        %p416 = pneg %p257
        %p417 = pneg %p254
        %s418 = sand.u32 %s33, 1
        %s419 = scalar_lea.sflag [#allocation7], %s418
        %s420 = sand.u32 %s244, 1
        %s421 = scalar_lea.vmem [#allocation8], %s420
        %p422 = pneg %p283
        %p423 = pneg %p280
        %s424 = sand.u32 %s270, 1
        %s425 = scalar_lea.sflag [#allocation10], %s424
        %s426 = sand.u32 %s270, 1
        %s427 = scalar_lea.vmem [#allocation9], %s426
        %p428 = scmp.lt.s32.totalorder %s33, 1
        %s429 = scalar_select %p428, %s33, 1
        %s430 = smul.addr %s429, 4
        %s431 = scalar_lea.vmem %s1, %s430
        %p432 = scmp.lt.s32.totalorder %s33, 1
        %s433 = scalar_select %p432, %s33, 1
        %s434 = smul.addr %s433, 8
        %s435 = scalar_lea.vmem %s3, %s434
        %p436 = scmp.lt.s32.totalorder %s33, 1
        %s437 = scalar_select %p436, %s33, 1
        %s438 = smul.addr %s437, 8
        %s439 = scalar_lea.vmem %s4, %s438
        %p440 = scmp.lt.s32.totalorder %s33, 1
        %s441 = scalar_select %p440, %s33, 1
        %s442 = smul.addr %s441, 8
        %s443 = scalar_lea.vmem %s5, %s442
        %v444 = vld [vmem:[%s431] sm:$0xf]
        %v445 = vld [vmem:[%s2] sm:$0x3]
        %v446 = vld [vmem:[%s439] sm:$0xff]
        %v447 = vld [vmem:[%s443] sm:$0xff]
        %v448 = vld [vmem:[%s435] sm:$0xff]
        %vm449 = vcmp.lt.s32.totalorder %v448, 0
        %v450 = vadd.s32 %v448, 80
        %v451 = vsel %vm449, %v450, %v448
        %vm452 = vcmp.gt.s32.totalorder %v451, 0
        %v453 = vsel %vm452, %v451, 0
        %vm454 = vcmp.lt.s32.totalorder %v453, 79
        %v455 = vsel %vm454, %v453, 79
        %v456 = vlaneseq
        %v457 = vand.u32 %v456, 127
        %458 = vset.pattern.permute.xlu0 0
        %459 = vperm.xlu0 %458, %v455
        %v460 = vpop.permute.xlu0 %459
        %vm461 = vcmp.eq.s32.totalorder %v460, %v457
        %v462 = vsel %vm461, 1, 0
        %v463 = vcvt.s32.f32 %v462
        %v464 = vld [vmem:[%s365] sm:$0xff]
        %v465 = vld [vmem:[%s365 + $0x8] sm:$0xff]
        %v466 = vld [vmem:[%s365 + $0x10] sm:$0xff]
        %v467 = vld [vmem:[%s365 + $0x18] sm:$0xff]
        %v468 = vld [vmem:[%s365 + $0x20] sm:$0xff]
        %v469 = vld [vmem:[%s365 + $0x28] sm:$0xff]
        %v470 = vld [vmem:[%s365 + $0x30] sm:$0xff]
        %v471 = vld [vmem:[%s365 + $0x38] sm:$0xff]
        %v472 = vld [vmem:[%s365 + $0x40] sm:$0xff]
        %v473 = vld [vmem:[%s365 + $0x48] sm:$0xff]
        %vm474 = vcmask 654336
        %v476 = vsel %vm474, %v463, 0
        %478 = vmatprep.subr.mxu0 0.0
        %v479 = vand.u32 %v464, 4294901760
        %480 = vmatpush1.msra.mxu0 %v479
        %481 = vmatprep.subr.mxu0 0.0
        %v482 = vand.u32 %v465, 4294901760
        %483 = vmatpush1.msra.mxu0 %v482
        %484 = vmatprep.subr.mxu0 0.0
        %v485 = vand.u32 %v466, 4294901760
        %486 = vmatpush1.msra.mxu0 %v485
        %487 = vmatprep.subr.mxu0 0.0
        %v488 = vand.u32 %v467, 4294901760
        %489 = vmatpush1.msra.mxu0 %v488
        %490 = vmatprep.subr.mxu0 0.0
        %v491 = vand.u32 %v468, 4294901760
        %492 = vmatpush1.msra.mxu0 %v491
        %493 = vmatprep.subr.mxu0 0.0
        %v494 = vand.u32 %v469, 4294901760
        %495 = vmatpush1.msra.mxu0 %v494
        %496 = vmatprep.subr.mxu0 0.0
        %v497 = vand.u32 %v470, 4294901760
        %498 = vmatpush1.msra.mxu0 %v497
        %499 = vmatprep.subr.mxu0 0.0
        %v500 = vand.u32 %v471, 4294901760
        %501 = vmatpush1.msra.mxu0 %v500
        %502 = vmatprep.subr.mxu0 0.0
        %v503 = vand.u32 %v472, 4294901760
        %504 = vmatpush1.msra.mxu0 %v503
        %505 = vmatprep.subr.mxu0 0.0
        %v506 = vand.u32 %v473, 4294901760
        %507 = vmatpush1.msra.mxu0 %v506
        %508 = vmatprep.subr.mxu0 0.0
        %509 = vmatpush1.msra.mxu0 0.0
        %510 = vmatprep.subr.mxu0 0.0
        %511 = vmatpush1.msra.mxu0 0.0
        %512 = vmatprep.subr.mxu0 0.0
        %513 = vmatpush1.msra.mxu0 0.0
        %514 = vmatprep.subr.mxu0 0.0
        %515 = vmatpush1.msra.mxu0 0.0
        %516 = vmatprep.subr.mxu0 0.0
        %517 = vmatpush1.msra.mxu0 0.0
        %518 = vmatprep.subr.mxu0 0.0
        %519 = vmatpush1.msra.mxu0 0.0
        %520 = vmatprep.subr.mxu0 0.0
        %521 = vmatpush1.msra.mxu0 0.0
        %522 = vmatprep.subr.mxu0 0.0
        %523 = vmatpush1.msra.mxu0 0.0
        %524 = vmatprep.subr.mxu0 0.0
        %525 = vmatpush1.msra.mxu0 0.0
        %526 = vmatprep.subr.mxu0 0.0
        %527 = vmatpush1.msra.mxu0 0.0
        %528 = vmatprep.subr.mxu0 0.0
        %529 = vmatpush1.msra.mxu0 0.0
        %530 = vmatprep.subr.mxu0 0.0
        %531 = vmatpush1.msra.mxu0 0.0
        %532 = vmatprep.subr.mxu0 0.0
        %533 = vmatpush1.msra.mxu0 0.0
        %534 = vmatprep.subr.mxu0 0.0
        %535 = vmatpush1.msra.mxu0 0.0
        %536 = vmatprep.subr.mxu0 0.0
        %537 = vmatpush1.msra.mxu0 0.0
        %538 = vmatprep.subr.mxu0 0.0
        %539 = vmatpush1.msra.mxu0 0.0
        %540 = vmatprep.subr.mxu0 0.0
        %541 = vmatpush1.msra.mxu0 0.0
        %542 = vmatprep.subr.mxu0 0.0
        %543 = vmatpush1.msra.mxu0 0.0
        %544 = vmatprep.subr.mxu0 0.0
        %545 = vmatpush1.msra.mxu0 0.0
        %546 = vmatprep.subr.mxu0 0.0
        %547 = vmatpush1.msra.mxu0 0.0
        %548 = vmatprep.subr.mxu0 0.0
        %549 = vmatpush1.msra.mxu0 0.0
        %550 = vmatprep.subr.mxu0 0.0
        %551 = vmatpush1.msra.mxu0 0.0
        %552 = vmatprep.mubr.f32.mxu0 0.0
        %v553 = vand.u32 %v476, 4294901760
        %v554 = vsub.f32 %v476, %v553
        %v555 = vand.u32 %v554, 4294901760
        %v556 = vsub.f32 %v554, %v555
        %v557 = vand.u32 %v556, 4294901760
        %558 = vmatmul.mubr.f32.gmra.mrb[0].mxu0 %v557
        %v559 = vpop.f32.mrb[0].mxu0
        %v560 = vadd.f32 0.0, %v559
        %v561 = vpop.f32.mrb[0].mxu0
        %562 = vdwg.mxu0
        %563 = vmatprep.subr.mxu0 0.0
        %v564 = vand.u32 %v464, 4294901760
        %v565 = vsub.f32 %v464, %v564
        %v566 = vand.u32 %v565, 4294901760
        %v567 = vsub.f32 %v565, %v566
        %v568 = vand.u32 %v567, 4294901760
        %569 = vmatpush1.msra.mxu0 %v568
        %570 = vmatprep.subr.mxu0 0.0
        %v571 = vand.u32 %v465, 4294901760
        %v572 = vsub.f32 %v465, %v571
        %v573 = vand.u32 %v572, 4294901760
        %v574 = vsub.f32 %v572, %v573
        %v575 = vand.u32 %v574, 4294901760
        %576 = vmatpush1.msra.mxu0 %v575
        %577 = vmatprep.subr.mxu0 0.0
        %v578 = vand.u32 %v466, 4294901760
        %v579 = vsub.f32 %v466, %v578
        %v580 = vand.u32 %v579, 4294901760
        %v581 = vsub.f32 %v579, %v580
        %v582 = vand.u32 %v581, 4294901760
        %583 = vmatpush1.msra.mxu0 %v582
        %584 = vmatprep.subr.mxu0 0.0
        %v585 = vand.u32 %v467, 4294901760
        %v586 = vsub.f32 %v467, %v585
        %v587 = vand.u32 %v586, 4294901760
        %v588 = vsub.f32 %v586, %v587
        %v589 = vand.u32 %v588, 4294901760
        %590 = vmatpush1.msra.mxu0 %v589
        %591 = vmatprep.subr.mxu0 0.0
        %v592 = vand.u32 %v468, 4294901760
        %v593 = vsub.f32 %v468, %v592
        %v594 = vand.u32 %v593, 4294901760
        %v595 = vsub.f32 %v593, %v594
        %v596 = vand.u32 %v595, 4294901760
        %597 = vmatpush1.msra.mxu0 %v596
        %598 = vmatprep.subr.mxu0 0.0
        %v599 = vand.u32 %v469, 4294901760
        %v600 = vsub.f32 %v469, %v599
        %v601 = vand.u32 %v600, 4294901760
        %v602 = vsub.f32 %v600, %v601
        %v603 = vand.u32 %v602, 4294901760
        %604 = vmatpush1.msra.mxu0 %v603
        %605 = vmatprep.subr.mxu0 0.0
        %v606 = vand.u32 %v470, 4294901760
        %v607 = vsub.f32 %v470, %v606
        %v608 = vand.u32 %v607, 4294901760
        %v609 = vsub.f32 %v607, %v608
        %v610 = vand.u32 %v609, 4294901760
        %611 = vmatpush1.msra.mxu0 %v610
        %612 = vmatprep.subr.mxu0 0.0
        %v613 = vand.u32 %v471, 4294901760
        %v614 = vsub.f32 %v471, %v613
        %v615 = vand.u32 %v614, 4294901760
        %v616 = vsub.f32 %v614, %v615
        %v617 = vand.u32 %v616, 4294901760
        %618 = vmatpush1.msra.mxu0 %v617
        %619 = vmatprep.subr.mxu0 0.0
        %v620 = vand.u32 %v472, 4294901760
        %v621 = vsub.f32 %v472, %v620
        %v622 = vand.u32 %v621, 4294901760
        %v623 = vsub.f32 %v621, %v622
        %v624 = vand.u32 %v623, 4294901760
        %625 = vmatpush1.msra.mxu0 %v624
        %626 = vmatprep.subr.mxu0 0.0
        %v627 = vand.u32 %v473, 4294901760
        %v628 = vsub.f32 %v473, %v627
        %v629 = vand.u32 %v628, 4294901760
        %v630 = vsub.f32 %v628, %v629
        %v631 = vand.u32 %v630, 4294901760
        %632 = vmatpush1.msra.mxu0 %v631
        %633 = vmatprep.subr.mxu0 0.0
        %634 = vmatpush1.msra.mxu0 0.0
        %635 = vmatprep.subr.mxu0 0.0
        %636 = vmatpush1.msra.mxu0 0.0
        %637 = vmatprep.subr.mxu0 0.0
        %638 = vmatpush1.msra.mxu0 0.0
        %639 = vmatprep.subr.mxu0 0.0
        %640 = vmatpush1.msra.mxu0 0.0
        %641 = vmatprep.subr.mxu0 0.0
        %642 = vmatpush1.msra.mxu0 0.0
        %643 = vmatprep.subr.mxu0 0.0
        %644 = vmatpush1.msra.mxu0 0.0
        %645 = vmatprep.subr.mxu0 0.0
        %646 = vmatpush1.msra.mxu0 0.0
        %647 = vmatprep.subr.mxu0 0.0
        %648 = vmatpush1.msra.mxu0 0.0
        %649 = vmatprep.subr.mxu0 0.0
        %650 = vmatpush1.msra.mxu0 0.0
        %651 = vmatprep.subr.mxu0 0.0
        %652 = vmatpush1.msra.mxu0 0.0
        %653 = vmatprep.subr.mxu0 0.0
        %654 = vmatpush1.msra.mxu0 0.0
        %655 = vmatprep.subr.mxu0 0.0
        %656 = vmatpush1.msra.mxu0 0.0
        %657 = vmatprep.subr.mxu0 0.0
        %658 = vmatpush1.msra.mxu0 0.0
        %659 = vmatprep.subr.mxu0 0.0
        %660 = vmatpush1.msra.mxu0 0.0
        %661 = vmatprep.subr.mxu0 0.0
        %662 = vmatpush1.msra.mxu0 0.0
        %663 = vmatprep.subr.mxu0 0.0
        %664 = vmatpush1.msra.mxu0 0.0
        %665 = vmatprep.subr.mxu0 0.0
        %666 = vmatpush1.msra.mxu0 0.0
        %667 = vmatprep.subr.mxu0 0.0
        %668 = vmatpush1.msra.mxu0 0.0
        %669 = vmatprep.subr.mxu0 0.0
        %670 = vmatpush1.msra.mxu0 0.0
        %671 = vmatprep.subr.mxu0 0.0
        %672 = vmatpush1.msra.mxu0 0.0
        %673 = vmatprep.subr.mxu0 0.0
        %674 = vmatpush1.msra.mxu0 0.0
        %675 = vmatprep.subr.mxu0 0.0
        %676 = vmatpush1.msra.mxu0 0.0
        %677 = vmatprep.mubr.f32.mxu0 0.0
        %v678 = vand.u32 %v476, 4294901760
        %679 = vmatmul.mubr.f32.gmra.mrb[0].mxu0 %v678
        %v680 = vpop.f32.mrb[0].mxu0
        %v681 = vadd.f32 %v560, %v680
        %v682 = vpop.f32.mrb[0].mxu0
        %683 = vdwg.mxu0
        %684 = vmatprep.subr.mxu0 0.0
        %v685 = vand.u32 %v464, 4294901760
        %v686 = vsub.f32 %v464, %v685
        %687 = vmatpush1.msra.mxu0 %v686
        %688 = vmatprep.subr.mxu0 0.0
        %v689 = vand.u32 %v465, 4294901760
        %v690 = vsub.f32 %v465, %v689
        %691 = vmatpush1.msra.mxu0 %v690
        %692 = vmatprep.subr.mxu0 0.0
        %v693 = vand.u32 %v466, 4294901760
        %v694 = vsub.f32 %v466, %v693
        %695 = vmatpush1.msra.mxu0 %v694
        %696 = vmatprep.subr.mxu0 0.0
        %v697 = vand.u32 %v467, 4294901760
        %v698 = vsub.f32 %v467, %v697
        %699 = vmatpush1.msra.mxu0 %v698
        %700 = vmatprep.subr.mxu0 0.0
        %v701 = vand.u32 %v468, 4294901760
        %v702 = vsub.f32 %v468, %v701
        %703 = vmatpush1.msra.mxu0 %v702
        %704 = vmatprep.subr.mxu0 0.0
        %v705 = vand.u32 %v469, 4294901760
        %v706 = vsub.f32 %v469, %v705
        %707 = vmatpush1.msra.mxu0 %v706
        %708 = vmatprep.subr.mxu0 0.0
        %v709 = vand.u32 %v470, 4294901760
        %v710 = vsub.f32 %v470, %v709
        %711 = vmatpush1.msra.mxu0 %v710
        %712 = vmatprep.subr.mxu0 0.0
        %v713 = vand.u32 %v471, 4294901760
        %v714 = vsub.f32 %v471, %v713
        %715 = vmatpush1.msra.mxu0 %v714
        %716 = vmatprep.subr.mxu0 0.0
        %v717 = vand.u32 %v472, 4294901760
        %v718 = vsub.f32 %v472, %v717
        %719 = vmatpush1.msra.mxu0 %v718
        %720 = vmatprep.subr.mxu0 0.0
        %v721 = vand.u32 %v473, 4294901760
        %v722 = vsub.f32 %v473, %v721
        %723 = vmatpush1.msra.mxu0 %v722
        %724 = vmatprep.subr.mxu0 0.0
        %725 = vmatpush1.msra.mxu0 0.0
        %726 = vmatprep.subr.mxu0 0.0
        %727 = vmatpush1.msra.mxu0 0.0
        %728 = vmatprep.subr.mxu0 0.0
        %729 = vmatpush1.msra.mxu0 0.0
        %730 = vmatprep.subr.mxu0 0.0
        %731 = vmatpush1.msra.mxu0 0.0
        %732 = vmatprep.subr.mxu0 0.0
        %733 = vmatpush1.msra.mxu0 0.0
        %734 = vmatprep.subr.mxu0 0.0
        %735 = vmatpush1.msra.mxu0 0.0
        %736 = vmatprep.subr.mxu0 0.0
        %737 = vmatpush1.msra.mxu0 0.0
        %738 = vmatprep.subr.mxu0 0.0
        %739 = vmatpush1.msra.mxu0 0.0
        %740 = vmatprep.subr.mxu0 0.0
        %741 = vmatpush1.msra.mxu0 0.0
        %742 = vmatprep.subr.mxu0 0.0
        %743 = vmatpush1.msra.mxu0 0.0
        %744 = vmatprep.subr.mxu0 0.0
        %745 = vmatpush1.msra.mxu0 0.0
        %746 = vmatprep.subr.mxu0 0.0
        %747 = vmatpush1.msra.mxu0 0.0
        %748 = vmatprep.subr.mxu0 0.0
        %749 = vmatpush1.msra.mxu0 0.0
        %750 = vmatprep.subr.mxu0 0.0
        %751 = vmatpush1.msra.mxu0 0.0
        %752 = vmatprep.subr.mxu0 0.0
        %753 = vmatpush1.msra.mxu0 0.0
        %754 = vmatprep.subr.mxu0 0.0
        %755 = vmatpush1.msra.mxu0 0.0
        %756 = vmatprep.subr.mxu0 0.0
        %757 = vmatpush1.msra.mxu0 0.0
        %758 = vmatprep.subr.mxu0 0.0
        %759 = vmatpush1.msra.mxu0 0.0
        %760 = vmatprep.subr.mxu0 0.0
        %761 = vmatpush1.msra.mxu0 0.0
        %762 = vmatprep.subr.mxu0 0.0
        %763 = vmatpush1.msra.mxu0 0.0
        %764 = vmatprep.subr.mxu0 0.0
        %765 = vmatpush1.msra.mxu0 0.0
        %766 = vmatprep.subr.mxu0 0.0
        %767 = vmatpush1.msra.mxu0 0.0
        %768 = vmatprep.mubr.f32.mxu0 0.0
        %v769 = vand.u32 %v476, 4294901760
        %v770 = vsub.f32 %v476, %v769
        %771 = vmatmul.mubr.f32.gmra.mrb[0].mxu0 %v770
        %v772 = vpop.f32.mrb[0].mxu0
        %v773 = vadd.f32 %v681, %v772
        %v774 = vpop.f32.mrb[0].mxu0
        %775 = vdwg.mxu0
        %776 = vmatprep.subr.mxu0 0.0
        %v777 = vand.u32 %v464, 4294901760
        %778 = vmatpush1.msra.mxu0 %v777
        %779 = vmatprep.subr.mxu0 0.0
        %v780 = vand.u32 %v465, 4294901760
        %781 = vmatpush1.msra.mxu0 %v780
        %782 = vmatprep.subr.mxu0 0.0
        %v783 = vand.u32 %v466, 4294901760
        %784 = vmatpush1.msra.mxu0 %v783
        %785 = vmatprep.subr.mxu0 0.0
        %v786 = vand.u32 %v467, 4294901760
        %787 = vmatpush1.msra.mxu0 %v786
        %788 = vmatprep.subr.mxu0 0.0
        %v789 = vand.u32 %v468, 4294901760
        %790 = vmatpush1.msra.mxu0 %v789
        %791 = vmatprep.subr.mxu0 0.0
        %v792 = vand.u32 %v469, 4294901760
        %793 = vmatpush1.msra.mxu0 %v792
        %794 = vmatprep.subr.mxu0 0.0
        %v795 = vand.u32 %v470, 4294901760
        %796 = vmatpush1.msra.mxu0 %v795
        %797 = vmatprep.subr.mxu0 0.0
        %v798 = vand.u32 %v471, 4294901760
        %799 = vmatpush1.msra.mxu0 %v798
        %800 = vmatprep.subr.mxu0 0.0
        %v801 = vand.u32 %v472, 4294901760
        %802 = vmatpush1.msra.mxu0 %v801
        %803 = vmatprep.subr.mxu0 0.0
        %v804 = vand.u32 %v473, 4294901760
        %805 = vmatpush1.msra.mxu0 %v804
        %806 = vmatprep.subr.mxu0 0.0
        %807 = vmatpush1.msra.mxu0 0.0
        %808 = vmatprep.subr.mxu0 0.0
        %809 = vmatpush1.msra.mxu0 0.0
        %810 = vmatprep.subr.mxu0 0.0
        %811 = vmatpush1.msra.mxu0 0.0
        %812 = vmatprep.subr.mxu0 0.0
        %813 = vmatpush1.msra.mxu0 0.0
        %814 = vmatprep.subr.mxu0 0.0
        %815 = vmatpush1.msra.mxu0 0.0
        %816 = vmatprep.subr.mxu0 0.0
        %817 = vmatpush1.msra.mxu0 0.0
        %818 = vmatprep.subr.mxu0 0.0
        %819 = vmatpush1.msra.mxu0 0.0
        %820 = vmatprep.subr.mxu0 0.0
        %821 = vmatpush1.msra.mxu0 0.0
        %822 = vmatprep.subr.mxu0 0.0
        %823 = vmatpush1.msra.mxu0 0.0
        %824 = vmatprep.subr.mxu0 0.0
        %825 = vmatpush1.msra.mxu0 0.0
        %826 = vmatprep.subr.mxu0 0.0
        %827 = vmatpush1.msra.mxu0 0.0
        %828 = vmatprep.subr.mxu0 0.0
        %829 = vmatpush1.msra.mxu0 0.0
        %830 = vmatprep.subr.mxu0 0.0
        %831 = vmatpush1.msra.mxu0 0.0
        %832 = vmatprep.subr.mxu0 0.0
        %833 = vmatpush1.msra.mxu0 0.0
        %834 = vmatprep.subr.mxu0 0.0
        %835 = vmatpush1.msra.mxu0 0.0
        %836 = vmatprep.subr.mxu0 0.0
        %837 = vmatpush1.msra.mxu0 0.0
        %838 = vmatprep.subr.mxu0 0.0
        %839 = vmatpush1.msra.mxu0 0.0
        %840 = vmatprep.subr.mxu0 0.0
        %841 = vmatpush1.msra.mxu0 0.0
        %842 = vmatprep.subr.mxu0 0.0
        %843 = vmatpush1.msra.mxu0 0.0
        %844 = vmatprep.subr.mxu0 0.0
        %845 = vmatpush1.msra.mxu0 0.0
        %846 = vmatprep.subr.mxu0 0.0
        %847 = vmatpush1.msra.mxu0 0.0
        %848 = vmatprep.subr.mxu0 0.0
        %849 = vmatpush1.msra.mxu0 0.0
        %850 = vmatprep.mubr.f32.mxu0 0.0
        %v851 = vand.u32 %v476, 4294901760
        %v852 = vsub.f32 %v476, %v851
        %v853 = vand.u32 %v852, 4294901760
        %854 = vmatmul.mubr.f32.gmra.mrb[0].mxu0 %v853
        %v855 = vpop.f32.mrb[0].mxu0
        %v856 = vadd.f32 %v773, %v855
        %v857 = vpop.f32.mrb[0].mxu0
        %858 = vdwg.mxu0
        %859 = vmatprep.subr.mxu0 0.0
        %v860 = vand.u32 %v464, 4294901760
        %v861 = vsub.f32 %v464, %v860
        %v862 = vand.u32 %v861, 4294901760
        %863 = vmatpush1.msra.mxu0 %v862
        %864 = vmatprep.subr.mxu0 0.0
        %v865 = vand.u32 %v465, 4294901760
        %v866 = vsub.f32 %v465, %v865
        %v867 = vand.u32 %v866, 4294901760
        %868 = vmatpush1.msra.mxu0 %v867
        %869 = vmatprep.subr.mxu0 0.0
        %v870 = vand.u32 %v466, 4294901760
        %v871 = vsub.f32 %v466, %v870
        %v872 = vand.u32 %v871, 4294901760
        %873 = vmatpush1.msra.mxu0 %v872
        %874 = vmatprep.subr.mxu0 0.0
        %v875 = vand.u32 %v467, 4294901760
        %v876 = vsub.f32 %v467, %v875
        %v877 = vand.u32 %v876, 4294901760
        %878 = vmatpush1.msra.mxu0 %v877
        %879 = vmatprep.subr.mxu0 0.0
        %v880 = vand.u32 %v468, 4294901760
        %v881 = vsub.f32 %v468, %v880
        %v882 = vand.u32 %v881, 4294901760
        %883 = vmatpush1.msra.mxu0 %v882
        %884 = vmatprep.subr.mxu0 0.0
        %v885 = vand.u32 %v469, 4294901760
        %v886 = vsub.f32 %v469, %v885
        %v887 = vand.u32 %v886, 4294901760
        %888 = vmatpush1.msra.mxu0 %v887
        %889 = vmatprep.subr.mxu0 0.0
        %v890 = vand.u32 %v470, 4294901760
        %v891 = vsub.f32 %v470, %v890
        %v892 = vand.u32 %v891, 4294901760
        %893 = vmatpush1.msra.mxu0 %v892
        %894 = vmatprep.subr.mxu0 0.0
        %v895 = vand.u32 %v471, 4294901760
        %v896 = vsub.f32 %v471, %v895
        %v897 = vand.u32 %v896, 4294901760
        %898 = vmatpush1.msra.mxu0 %v897
        %899 = vmatprep.subr.mxu0 0.0
        %v900 = vand.u32 %v472, 4294901760
        %v901 = vsub.f32 %v472, %v900
        %v902 = vand.u32 %v901, 4294901760
        %903 = vmatpush1.msra.mxu0 %v902
        %904 = vmatprep.subr.mxu0 0.0
        %v905 = vand.u32 %v473, 4294901760
        %v906 = vsub.f32 %v473, %v905
        %v907 = vand.u32 %v906, 4294901760
        %908 = vmatpush1.msra.mxu0 %v907
        %909 = vmatprep.subr.mxu0 0.0
        %910 = vmatpush1.msra.mxu0 0.0
        %911 = vmatprep.subr.mxu0 0.0
        %912 = vmatpush1.msra.mxu0 0.0
        %913 = vmatprep.subr.mxu0 0.0
        %914 = vmatpush1.msra.mxu0 0.0
        %915 = vmatprep.subr.mxu0 0.0
        %916 = vmatpush1.msra.mxu0 0.0
        %917 = vmatprep.subr.mxu0 0.0
        %918 = vmatpush1.msra.mxu0 0.0
        %919 = vmatprep.subr.mxu0 0.0
        %920 = vmatpush1.msra.mxu0 0.0
        %921 = vmatprep.subr.mxu0 0.0
        %922 = vmatpush1.msra.mxu0 0.0
        %923 = vmatprep.subr.mxu0 0.0
        %924 = vmatpush1.msra.mxu0 0.0
        %925 = vmatprep.subr.mxu0 0.0
        %926 = vmatpush1.msra.mxu0 0.0
        %927 = vmatprep.subr.mxu0 0.0
        %928 = vmatpush1.msra.mxu0 0.0
        %929 = vmatprep.subr.mxu0 0.0
        %930 = vmatpush1.msra.mxu0 0.0
        %931 = vmatprep.subr.mxu0 0.0
        %932 = vmatpush1.msra.mxu0 0.0
        %933 = vmatprep.subr.mxu0 0.0
        %934 = vmatpush1.msra.mxu0 0.0
        %935 = vmatprep.subr.mxu0 0.0
        %936 = vmatpush1.msra.mxu0 0.0
        %937 = vmatprep.subr.mxu0 0.0
        %938 = vmatpush1.msra.mxu0 0.0
        %939 = vmatprep.subr.mxu0 0.0
        %940 = vmatpush1.msra.mxu0 0.0
        %941 = vmatprep.subr.mxu0 0.0
        %942 = vmatpush1.msra.mxu0 0.0
        %943 = vmatprep.subr.mxu0 0.0
        %944 = vmatpush1.msra.mxu0 0.0
        %945 = vmatprep.subr.mxu0 0.0
        %946 = vmatpush1.msra.mxu0 0.0
        %947 = vmatprep.subr.mxu0 0.0
        %948 = vmatpush1.msra.mxu0 0.0
        %949 = vmatprep.subr.mxu0 0.0
        %950 = vmatpush1.msra.mxu0 0.0
        %951 = vmatprep.subr.mxu0 0.0
        %952 = vmatpush1.msra.mxu0 0.0
        %953 = vmatprep.mubr.f32.mxu0 0.0
        %v954 = vand.u32 %v476, 4294901760
        %955 = vmatmul.mubr.f32.gmra.mrb[0].mxu0 %v954
        %v956 = vpop.f32.mrb[0].mxu0
        %v957 = vadd.f32 %v856, %v956
        %v958 = vpop.f32.mrb[0].mxu0
        %959 = vdwg.mxu0
        %960 = vmatprep.subr.mxu0 0.0
        %v961 = vand.u32 %v464, 4294901760
        %962 = vmatpush1.msra.mxu0 %v961
        %963 = vmatprep.subr.mxu0 0.0
        %v964 = vand.u32 %v465, 4294901760
        %965 = vmatpush1.msra.mxu0 %v964
        %966 = vmatprep.subr.mxu0 0.0
        %v967 = vand.u32 %v466, 4294901760
        %968 = vmatpush1.msra.mxu0 %v967
        %969 = vmatprep.subr.mxu0 0.0
        %v970 = vand.u32 %v467, 4294901760
        %971 = vmatpush1.msra.mxu0 %v970
        %972 = vmatprep.subr.mxu0 0.0
        %v973 = vand.u32 %v468, 4294901760
        %974 = vmatpush1.msra.mxu0 %v973
        %975 = vmatprep.subr.mxu0 0.0
        %v976 = vand.u32 %v469, 4294901760
        %977 = vmatpush1.msra.mxu0 %v976
        %978 = vmatprep.subr.mxu0 0.0
        %v979 = vand.u32 %v470, 4294901760
        %980 = vmatpush1.msra.mxu0 %v979
        %981 = vmatprep.subr.mxu0 0.0
        %v982 = vand.u32 %v471, 4294901760
        %983 = vmatpush1.msra.mxu0 %v982
        %984 = vmatprep.subr.mxu0 0.0
        %v985 = vand.u32 %v472, 4294901760
        %986 = vmatpush1.msra.mxu0 %v985
        %987 = vmatprep.subr.mxu0 0.0
        %v988 = vand.u32 %v473, 4294901760
        %989 = vmatpush1.msra.mxu0 %v988
        %990 = vmatprep.subr.mxu0 0.0
        %991 = vmatpush1.msra.mxu0 0.0
        %992 = vmatprep.subr.mxu0 0.0
        %993 = vmatpush1.msra.mxu0 0.0
        %994 = vmatprep.subr.mxu0 0.0
        %995 = vmatpush1.msra.mxu0 0.0
        %996 = vmatprep.subr.mxu0 0.0
        %997 = vmatpush1.msra.mxu0 0.0
        %998 = vmatprep.subr.mxu0 0.0
        %999 = vmatpush1.msra.mxu0 0.0
        %1000 = vmatprep.subr.mxu0 0.0
        %1001 = vmatpush1.msra.mxu0 0.0
        %1002 = vmatprep.subr.mxu0 0.0
        %1003 = vmatpush1.msra.mxu0 0.0
        %1004 = vmatprep.subr.mxu0 0.0
        %1005 = vmatpush1.msra.mxu0 0.0
        %1006 = vmatprep.subr.mxu0 0.0
        %1007 = vmatpush1.msra.mxu0 0.0
        %1008 = vmatprep.subr.mxu0 0.0
        %1009 = vmatpush1.msra.mxu0 0.0
        %1010 = vmatprep.subr.mxu0 0.0
        %1011 = vmatpush1.msra.mxu0 0.0
        %1012 = vmatprep.subr.mxu0 0.0
        %1013 = vmatpush1.msra.mxu0 0.0
        %1014 = vmatprep.subr.mxu0 0.0
        %1015 = vmatpush1.msra.mxu0 0.0
        %1016 = vmatprep.subr.mxu0 0.0
        %1017 = vmatpush1.msra.mxu0 0.0
        %1018 = vmatprep.subr.mxu0 0.0
        %1019 = vmatpush1.msra.mxu0 0.0
        %1020 = vmatprep.subr.mxu0 0.0
        %1021 = vmatpush1.msra.mxu0 0.0
        %1022 = vmatprep.subr.mxu0 0.0
        %1023 = vmatpush1.msra.mxu0 0.0
        %1024 = vmatprep.subr.mxu0 0.0
        %1025 = vmatpush1.msra.mxu0 0.0
        %1026 = vmatprep.subr.mxu0 0.0
        %1027 = vmatpush1.msra.mxu0 0.0
        %1028 = vmatprep.subr.mxu0 0.0
        %1029 = vmatpush1.msra.mxu0 0.0
        %1030 = vmatprep.subr.mxu0 0.0
        %1031 = vmatpush1.msra.mxu0 0.0
        %1032 = vmatprep.subr.mxu0 0.0
        %1033 = vmatpush1.msra.mxu0 0.0
        %1034 = vmatprep.mubr.f32.mxu0 0.0
        %v1035 = vand.u32 %v476, 4294901760
        %1036 = vmatmul.mubr.f32.gmra.mrb[0].mxu0 %v1035
        %v1037 = vpop.f32.mrb[0].mxu0
        %v1038 = vadd.f32 %v957, %v1037
        %v1039 = vpop.f32.mrb[0].mxu0
        %1040 = vdwg.mxu0
        %vm1041 = vcmp.gt.s32.totalorder %v448, 0
        %v1042 = vsel %vm1041, %v448, 0
        %1044 = vset.pattern.permute.xlu0 2
        %1045 = vperm.xlu0 %1044, %v446
        %v1046 = vpop.permute.xlu0 %1045
        %v1048 = vlaneseq
        %v1049 = vshrl.u32 %v1048, 7
        %v1050 = vsub.s32 2, %v1049
        %v1051 = vrot.slane %v444, %v1050
        %v1052 = vmin.f32 %v1046, %v1051
        %1053 = vset.pattern.permute.xlu0 0
        %1054 = vperm.xlu0 %1053, %v446
        %v1055 = vpop.permute.xlu0 %1054
        %v1057 = vlaneseq
        %v1058 = vshrl.u32 %v1057, 7
        %v1059 = vsub.s32 0, %v1058
        %v1060 = vrot.slane %v444, %v1059
        %v1061 = vmax.f32 %v1055, %v1060
        %v1062 = vsub.f32 %v1052, %v1061
        %v1063 = vmax.f32 %v1062, 0.0
        %1064 = vset.pattern.permute.xlu0 3
        %1065 = vperm.xlu0 %1064, %v446
        %v1066 = vpop.permute.xlu0 %1065
        %v1068 = vlaneseq
        %v1069 = vshrl.u32 %v1068, 7
        %v1070 = vsub.s32 3, %v1069
        %v1071 = vrot.slane %v444, %v1070
        %v1072 = vmin.f32 %v1066, %v1071
        %1073 = vset.pattern.permute.xlu0 1
        %1074 = vperm.xlu0 %1073, %v446
        %v1075 = vpop.permute.xlu0 %1074
        %v1077 = vlaneseq
        %v1078 = vshrl.u32 %v1077, 7
        %v1079 = vsub.s32 1, %v1078
        %v1080 = vrot.slane %v444, %v1079
        %v1081 = vmax.f32 %v1075, %v1080
        %v1082 = vsub.f32 %v1072, %v1081
        %v1083 = vmax.f32 %v1082, 0.0
        %v1084 = vmul.f32 %v1063, %v1083
        %1085 = vrot.lane.b32.xlu0 %v446, 2
        %v1086 = vpop.permute.xlu0 %1085
        %v1088 = vsub.f32 %v446, %v1086
        %v1089 = vmax.f32 %v1088, 0.0
        %1091 = vrot.lane.b32.xlu0 %v1089, 127
        %v1092 = vpop.permute.xlu0 %1091
        %v1094 = vmul.f32 %v1089, %v1092
        %v1096 = vrot.slane %v444, 6
        %v1098 = vsub.f32 %v444, %v1096
        %v1099 = vmax.f32 %v1098, 0.0
        %v1101 = vrot.slane %v1099, 1
        %v1103 = vmul.f32 %v1099, %v1101
        %1105 = vset.pattern.permute.xlu0 2
        %1106 = vperm.xlu0 %1105, %v1094
        %v1107 = vpop.permute.xlu0 %1106
        %v1109 = vlaneseq
        %v1110 = vshrl.u32 %v1109, 7
        %v1111 = vsub.s32 2, %v1110
        %v1112 = vrot.slane %v1103, %v1111
        %v1113 = vadd.f32 %v1107, %v1112
        %v1114 = vsub.f32 %v1113, %v1084
        %v1115 = vadd.f32 %v1114, 1e-09
        %v1116 = vrcp.pop %v1115
        %v1117 = vmul.f32 %v1084, %v1116
        %v1118 = vmul.f32 %v1117, %v1117
        %v1119 = vmul.f32 %v1118, %v1118
        %v1120 = vmul.f32 %v1118, %v1119
        %v1121 = vmul.f32 %v1038, %v1120
        %v1122 = vlaneseq
        %v1123 = vshrl.u32 %v1122, 7
        %v1124 = vsub.s32 0, %v1123
        %v1125 = vrot.slane %v445, %v1124
        %v1126 = vsub.f32 %v1125, %v1055
        %v1127 = vlaneseq
        %v1128 = vshrl.u32 %v1127, 7
        %v1129 = vsub.s32 1, %v1128
        %v1130 = vrot.slane %v445, %v1129
        %v1131 = vsub.f32 %v1130, %v1075
        %v1132 = vmin.f32 %v1126, %v1131
        %v1133 = vsub.f32 %v1046, %v1125
        %v1134 = vsub.f32 %v1066, %v1130
        %v1135 = vmin.f32 %v1133, %v1134
        %v1136 = vmin.f32 %v1132, %v1135
        %vm1137 = vcmp.gt.f32.partialorder %v1136, 1e-09
        %v1138 = vsel %vm1137, 1, 0
        %v1139 = vcvt.s32.f32 %v1138
        %v1140 = vmul.f32 %v1121, %v1139
        %1141 = vmax.xlane.f32.xlu0 %v1140
        %v1142 = vpop.xlane.xlu0 %1141
        %vm1143 = vcmp.eq.f32.partialorder %v1140, %v1142
        %v1144 = vsel %vm1143, %v457, 128
        %v1145 = vand.u32 %v1144, 65535
        %v1146 = vshra.s32 %v1144, 16
        %v1147 = vcvt.s32.f32 %v1145
        %v1148 = vcvt.s32.f32 %v1146
        %1149 = vmin.xlane.f32.xlu0 %v1148
        %v1150 = vpop.xlane.xlu0 %1149
        %vm1151 = vcmp.eq.f32.partialorder %v1148, %v1150
        %v1152 = vsel %vm1151, %v1147, inf
        %1153 = vmin.xlane.f32.xlu0 %v1152
        %v1154 = vpop.xlane.xlu0 %1153
        %v1155 = vcvt.f32.s32 %v1154
        %v1156 = vcvt.f32.s32 %v1150
        %v1157 = vshll.u32 %v1156, 16
        %v1158 = vadd.s32 %v1157, %v1155
        %vm1159 = vcmp.eq.s32.totalorder %v457, %v1158
        %v1160 = vsel %vm1159, 1.0, 0.0
        %v1161 = vsel %vm1159, -3.4028235e+38, %v1140
        %1162 = vmax.xlane.f32.xlu0 %v1161
        %v1163 = vpop.xlane.xlu0 %1162
        %vm1164 = vcmp.eq.f32.partialorder %v1161, %v1163
        %v1165 = vsel %vm1164, %v457, 128
        %v1166 = vand.u32 %v1165, 65535
        %v1167 = vshra.s32 %v1165, 16
        %v1168 = vcvt.s32.f32 %v1166
        %v1169 = vcvt.s32.f32 %v1167
        %1170 = vmin.xlane.f32.xlu0 %v1169
        %v1171 = vpop.xlane.xlu0 %1170
        %vm1172 = vcmp.eq.f32.partialorder %v1169, %v1171
        %v1173 = vsel %vm1172, %v1168, inf
        %1174 = vmin.xlane.f32.xlu0 %v1173
        %v1175 = vpop.xlane.xlu0 %1174
        %v1176 = vcvt.f32.s32 %v1175
        %v1177 = vcvt.f32.s32 %v1171
        %v1178 = vshll.u32 %v1177, 16
        %v1179 = vadd.s32 %v1178, %v1176
        %vm1180 = vcmp.eq.s32.totalorder %v457, %v1179
        %v1181 = vsel %vm1180, 1.0, %v1160
        %v1182 = vsel %vm1180, -3.4028235e+38, %v1161
        %1183 = vmax.xlane.f32.xlu0 %v1182
        %v1184 = vpop.xlane.xlu0 %1183
        %vm1185 = vcmp.eq.f32.partialorder %v1182, %v1184
        %v1186 = vsel %vm1185, %v457, 128
        %v1187 = vand.u32 %v1186, 65535
        %v1188 = vshra.s32 %v1186, 16
        %v1189 = vcvt.s32.f32 %v1187
        %v1190 = vcvt.s32.f32 %v1188
        %1191 = vmin.xlane.f32.xlu0 %v1190
        %v1192 = vpop.xlane.xlu0 %1191
        %vm1193 = vcmp.eq.f32.partialorder %v1190, %v1192
        %v1194 = vsel %vm1193, %v1189, inf
        %1195 = vmin.xlane.f32.xlu0 %v1194
        %v1196 = vpop.xlane.xlu0 %1195
        %v1197 = vcvt.f32.s32 %v1196
        %v1198 = vcvt.f32.s32 %v1192
        %v1199 = vshll.u32 %v1198, 16
        %v1200 = vadd.s32 %v1199, %v1197
        %vm1201 = vcmp.eq.s32.totalorder %v457, %v1200
        %v1202 = vsel %vm1201, 1.0, %v1181
        %v1203 = vsel %vm1201, -3.4028235e+38, %v1182
        %1204 = vmax.xlane.f32.xlu0 %v1203
        %v1205 = vpop.xlane.xlu0 %1204
        %vm1206 = vcmp.eq.f32.partialorder %v1203, %v1205
        %v1207 = vsel %vm1206, %v457, 128
        %v1208 = vand.u32 %v1207, 65535
        %v1209 = vshra.s32 %v1207, 16
        %v1210 = vcvt.s32.f32 %v1208
        %v1211 = vcvt.s32.f32 %v1209
        %1212 = vmin.xlane.f32.xlu0 %v1211
        %v1213 = vpop.xlane.xlu0 %1212
        %vm1214 = vcmp.eq.f32.partialorder %v1211, %v1213
        %v1215 = vsel %vm1214, %v1210, inf
        %1216 = vmin.xlane.f32.xlu0 %v1215
        %v1217 = vpop.xlane.xlu0 %1216
        %v1218 = vcvt.f32.s32 %v1217
        %v1219 = vcvt.f32.s32 %v1213
        %v1220 = vshll.u32 %v1219, 16
        %v1221 = vadd.s32 %v1220, %v1218
        %vm1222 = vcmp.eq.s32.totalorder %v457, %v1221
        %v1223 = vsel %vm1222, 1.0, %v1202
        %v1224 = vsel %vm1222, -3.4028235e+38, %v1203
        %1225 = vmax.xlane.f32.xlu0 %v1224
        %v1226 = vpop.xlane.xlu0 %1225
        %vm1227 = vcmp.eq.f32.partialorder %v1224, %v1226
        %v1228 = vsel %vm1227, %v457, 128
        %v1229 = vand.u32 %v1228, 65535
        %v1230 = vshra.s32 %v1228, 16
        %v1231 = vcvt.s32.f32 %v1229
        %v1232 = vcvt.s32.f32 %v1230
        %1233 = vmin.xlane.f32.xlu0 %v1232
        %v1234 = vpop.xlane.xlu0 %1233
        %vm1235 = vcmp.eq.f32.partialorder %v1232, %v1234
        %v1236 = vsel %vm1235, %v1231, inf
        %1237 = vmin.xlane.f32.xlu0 %v1236
        %v1238 = vpop.xlane.xlu0 %1237
        %v1239 = vcvt.f32.s32 %v1238
        %v1240 = vcvt.f32.s32 %v1234
        %v1241 = vshll.u32 %v1240, 16
        %v1242 = vadd.s32 %v1241, %v1239
        %vm1243 = vcmp.eq.s32.totalorder %v457, %v1242
        %v1244 = vsel %vm1243, 1.0, %v1223
        %v1245 = vsel %vm1243, -3.4028235e+38, %v1224
        %1246 = vmax.xlane.f32.xlu0 %v1245
        %v1247 = vpop.xlane.xlu0 %1246
        %vm1248 = vcmp.eq.f32.partialorder %v1245, %v1247
        %v1249 = vsel %vm1248, %v457, 128
        %v1250 = vand.u32 %v1249, 65535
        %v1251 = vshra.s32 %v1249, 16
        %v1252 = vcvt.s32.f32 %v1250
        %v1253 = vcvt.s32.f32 %v1251
        %1254 = vmin.xlane.f32.xlu0 %v1253
        %v1255 = vpop.xlane.xlu0 %1254
        %vm1256 = vcmp.eq.f32.partialorder %v1253, %v1255
        %v1257 = vsel %vm1256, %v1252, inf
        %1258 = vmin.xlane.f32.xlu0 %v1257
        %v1259 = vpop.xlane.xlu0 %1258
        %v1260 = vcvt.f32.s32 %v1259
        %v1261 = vcvt.f32.s32 %v1255
        %v1262 = vshll.u32 %v1261, 16
        %v1263 = vadd.s32 %v1262, %v1260
        %vm1264 = vcmp.eq.s32.totalorder %v457, %v1263
        %v1265 = vsel %vm1264, 1.0, %v1244
        %v1266 = vsel %vm1264, -3.4028235e+38, %v1245
        %1267 = vmax.xlane.f32.xlu0 %v1266
        %v1268 = vpop.xlane.xlu0 %1267
        %vm1269 = vcmp.eq.f32.partialorder %v1266, %v1268
        %v1270 = vsel %vm1269, %v457, 128
        %v1271 = vand.u32 %v1270, 65535
        %v1272 = vshra.s32 %v1270, 16
        %v1273 = vcvt.s32.f32 %v1271
        %v1274 = vcvt.s32.f32 %v1272
        %1275 = vmin.xlane.f32.xlu0 %v1274
        %v1276 = vpop.xlane.xlu0 %1275
        %vm1277 = vcmp.eq.f32.partialorder %v1274, %v1276
        %v1278 = vsel %vm1277, %v1273, inf
        %1279 = vmin.xlane.f32.xlu0 %v1278
        %v1280 = vpop.xlane.xlu0 %1279
        %v1281 = vcvt.f32.s32 %v1280
        %v1282 = vcvt.f32.s32 %v1276
        %v1283 = vshll.u32 %v1282, 16
        %v1284 = vadd.s32 %v1283, %v1281
        %vm1285 = vcmp.eq.s32.totalorder %v457, %v1284
        %v1286 = vsel %vm1285, 1.0, %v1265
        %v1287 = vsel %vm1285, -3.4028235e+38, %v1266
        %1288 = vmax.xlane.f32.xlu0 %v1287
        %v1289 = vpop.xlane.xlu0 %1288
        %vm1290 = vcmp.eq.f32.partialorder %v1287, %v1289
        %v1291 = vsel %vm1290, %v457, 128
        %v1292 = vand.u32 %v1291, 65535
        %v1293 = vshra.s32 %v1291, 16
        %v1294 = vcvt.s32.f32 %v1292
        %v1295 = vcvt.s32.f32 %v1293
        %1296 = vmin.xlane.f32.xlu0 %v1295
        %v1297 = vpop.xlane.xlu0 %1296
        %vm1298 = vcmp.eq.f32.partialorder %v1295, %v1297
        %v1299 = vsel %vm1298, %v1294, inf
        %1300 = vmin.xlane.f32.xlu0 %v1299
        %v1301 = vpop.xlane.xlu0 %1300
        %v1302 = vcvt.f32.s32 %v1301
        %v1303 = vcvt.f32.s32 %v1297
        %v1304 = vshll.u32 %v1303, 16
        %v1305 = vadd.s32 %v1304, %v1302
        %vm1306 = vcmp.eq.s32.totalorder %v457, %v1305
        %v1307 = vsel %vm1306, 1.0, %v1286
        %v1308 = vsel %vm1306, -3.4028235e+38, %v1287
        %1309 = vmax.xlane.f32.xlu0 %v1308
        %v1310 = vpop.xlane.xlu0 %1309
        %vm1311 = vcmp.eq.f32.partialorder %v1308, %v1310
        %v1312 = vsel %vm1311, %v457, 128
        %v1313 = vand.u32 %v1312, 65535
        %v1314 = vshra.s32 %v1312, 16
        %v1315 = vcvt.s32.f32 %v1313
        %v1316 = vcvt.s32.f32 %v1314
        %1317 = vmin.xlane.f32.xlu0 %v1316
        %v1318 = vpop.xlane.xlu0 %1317
        %vm1319 = vcmp.eq.f32.partialorder %v1316, %v1318
        %v1320 = vsel %vm1319, %v1315, inf
        %1321 = vmin.xlane.f32.xlu0 %v1320
        %v1322 = vpop.xlane.xlu0 %1321
        %v1323 = vcvt.f32.s32 %v1322
        %v1324 = vcvt.f32.s32 %v1318
        %v1325 = vshll.u32 %v1324, 16
        %v1326 = vadd.s32 %v1325, %v1323
        %vm1327 = vcmp.eq.s32.totalorder %v457, %v1326
        %v1328 = vsel %vm1327, 1.0, %v1307
        %v1329 = vsel %vm1327, -3.4028235e+38, %v1308
        %1330 = vmax.xlane.f32.xlu0 %v1329
        %v1331 = vpop.xlane.xlu0 %1330
        %vm1332 = vcmp.eq.f32.partialorder %v1329, %v1331
        %v1333 = vsel %vm1332, %v457, 128
        %v1334 = vand.u32 %v1333, 65535
        %v1335 = vshra.s32 %v1333, 16
        %v1336 = vcvt.s32.f32 %v1334
        %v1337 = vcvt.s32.f32 %v1335
        %1338 = vmin.xlane.f32.xlu0 %v1337
        %v1339 = vpop.xlane.xlu0 %1338
        %vm1340 = vcmp.eq.f32.partialorder %v1337, %v1339
        %v1341 = vsel %vm1340, %v1336, inf
        %1342 = vmin.xlane.f32.xlu0 %v1341
        %v1343 = vpop.xlane.xlu0 %1342
        %v1344 = vcvt.f32.s32 %v1343
        %v1345 = vcvt.f32.s32 %v1339
        %v1346 = vshll.u32 %v1345, 16
        %v1347 = vadd.s32 %v1346, %v1344
        %vm1348 = vcmp.eq.s32.totalorder %v457, %v1347
        %v1349 = vsel %vm1348, 1.0, %v1328
        %v1350 = vsel %vm1348, -3.4028235e+38, %v1329
        %1351 = vmax.xlane.f32.xlu0 %v1350
        %v1352 = vpop.xlane.xlu0 %1351
        %vm1353 = vcmp.eq.f32.partialorder %v1350, %v1352
        %v1354 = vsel %vm1353, %v457, 128
        %v1355 = vand.u32 %v1354, 65535
        %v1356 = vshra.s32 %v1354, 16
        %v1357 = vcvt.s32.f32 %v1355
        %v1358 = vcvt.s32.f32 %v1356
        %1359 = vmin.xlane.f32.xlu0 %v1358
        %v1360 = vpop.xlane.xlu0 %1359
        %vm1361 = vcmp.eq.f32.partialorder %v1358, %v1360
        %v1362 = vsel %vm1361, %v1357, inf
        %1363 = vmin.xlane.f32.xlu0 %v1362
        %v1364 = vpop.xlane.xlu0 %1363
        %v1365 = vcvt.f32.s32 %v1364
        %v1366 = vcvt.f32.s32 %v1360
        %v1367 = vshll.u32 %v1366, 16
        %v1368 = vadd.s32 %v1367, %v1365
        %vm1369 = vcmp.eq.s32.totalorder %v457, %v1368
        %v1370 = vsel %vm1369, 1.0, %v1349
        %v1371 = vsel %vm1369, -3.4028235e+38, %v1350
        %1372 = vmax.xlane.f32.xlu0 %v1371
        %v1373 = vpop.xlane.xlu0 %1372
        %vm1374 = vcmp.eq.f32.partialorder %v1371, %v1373
        %v1375 = vsel %vm1374, %v457, 128
        %v1376 = vand.u32 %v1375, 65535
        %v1377 = vshra.s32 %v1375, 16
        %v1378 = vcvt.s32.f32 %v1376
        %v1379 = vcvt.s32.f32 %v1377
        %1380 = vmin.xlane.f32.xlu0 %v1379
        %v1381 = vpop.xlane.xlu0 %1380
        %vm1382 = vcmp.eq.f32.partialorder %v1379, %v1381
        %v1383 = vsel %vm1382, %v1378, inf
        %1384 = vmin.xlane.f32.xlu0 %v1383
        %v1385 = vpop.xlane.xlu0 %1384
        %v1386 = vcvt.f32.s32 %v1385
        %v1387 = vcvt.f32.s32 %v1381
        %v1388 = vshll.u32 %v1387, 16
        %v1389 = vadd.s32 %v1388, %v1386
        %vm1390 = vcmp.eq.s32.totalorder %v457, %v1389
        %v1391 = vsel %vm1390, 1.0, %v1370
        %v1392 = vsel %vm1390, -3.4028235e+38, %v1371
        %1393 = vmax.xlane.f32.xlu0 %v1392
        %v1394 = vpop.xlane.xlu0 %1393
        %vm1395 = vcmp.eq.f32.partialorder %v1392, %v1394
        %v1396 = vsel %vm1395, %v457, 128
        %v1397 = vand.u32 %v1396, 65535
        %v1398 = vshra.s32 %v1396, 16
        %v1399 = vcvt.s32.f32 %v1397
        %v1400 = vcvt.s32.f32 %v1398
        %1401 = vmin.xlane.f32.xlu0 %v1400
        %v1402 = vpop.xlane.xlu0 %1401
        %vm1403 = vcmp.eq.f32.partialorder %v1400, %v1402
        %v1404 = vsel %vm1403, %v1399, inf
        %1405 = vmin.xlane.f32.xlu0 %v1404
        %v1406 = vpop.xlane.xlu0 %1405
        %v1407 = vcvt.f32.s32 %v1406
        %v1408 = vcvt.f32.s32 %v1402
        %v1409 = vshll.u32 %v1408, 16
        %v1410 = vadd.s32 %v1409, %v1407
        %vm1411 = vcmp.eq.s32.totalorder %v457, %v1410
        %v1412 = vsel %vm1411, 1.0, %v1391
        %v1413 = vmul.f32 %v1412, %v1139
        %1415 = vset.pattern.permute.xlu0 0
        %1416 = vperm.xlu0 %1415, %v447
        %v1417 = vpop.permute.xlu0 %1416
        %v1419 = vmul.f32 %v1413, %v1417
        %v1420 = vrot.slane %v1419, 4
        %v1421 = vadd.f32 %v1419, %v1420
        %v1422 = vrot.slane %v1421, 2
        %v1423 = vadd.f32 %v1421, %v1422
        %v1424 = vrot.slane %v1423, 1
        %v1425 = vadd.f32 %v1423, %v1424
        %v1426 = vlaneseq
        %v1427 = vshrl.u32 %v1426, 7
        %v1428 = vrot.slane %v1117, 4
        %v1429 = vmax.f32 %v1117, %v1428
        %v1430 = vrot.slane %v1429, 2
        %v1431 = vmax.f32 %v1429, %v1430
        %v1432 = vrot.slane %v1431, 1
        %v1433 = vmax.f32 %v1431, %v1432
        %vm1434 = vcmp.eq.f32.partialorder %v1117, %v1433
        %v1435 = vsel %vm1434, %v1427, 8
        %v1436 = vrot.slane %v1435, 4
        %vm1437 = vcmp.lt.s32.totalorder %v1435, %v1436
        %v1438 = vsel %vm1437, %v1435, %v1436
        %v1439 = vrot.slane %v1438, 2
        %vm1440 = vcmp.lt.s32.totalorder %v1438, %v1439
        %v1441 = vsel %vm1440, %v1438, %v1439
        %v1442 = vrot.slane %v1441, 1
        %vm1443 = vcmp.lt.s32.totalorder %v1441, %v1442
        %v1444 = vsel %vm1443, %v1441, %v1442
        %vm1445 = vcmp.eq.s32.totalorder %v1427, %v1444
        %v1446 = vsel %vm1445, 1, 0
        %v1447 = vcvt.s32.f32 %v1446
        %vm1448 = vcmp.gt.f32.partialorder %v1425, 1.0
        %v1449 = vsel %vm1448, 1, 0
        %vm1450 = vcmp.eq.s32.totalorder %v1449, 1
        %v1451 = vsel %vm1450, %v1447, %v1419
        %v1452 = vrot.slane %v1451, 4
        %v1453 = vadd.f32 %v1451, %v1452
        %v1454 = vrot.slane %v1453, 2
        %v1455 = vadd.f32 %v1453, %v1454
        %v1456 = vrot.slane %v1455, 1
        %v1457 = vadd.f32 %v1455, %v1456
        %v1458 = vrot.slane %v1451, 4
        %v1459 = vmax.f32 %v1451, %v1458
        %v1460 = vrot.slane %v1459, 2
        %v1461 = vmax.f32 %v1459, %v1460
        %v1462 = vrot.slane %v1461, 1
        %v1463 = vmax.f32 %v1461, %v1462
        %vm1464 = vcmp.eq.f32.partialorder %v1451, %v1463
        %v1465 = vsel %vm1464, %v1427, 8
        %v1466 = vrot.slane %v1465, 4
        %vm1467 = vcmp.lt.s32.totalorder %v1465, %v1466
        %v1468 = vsel %vm1467, %v1465, %v1466
        %v1469 = vrot.slane %v1468, 2
        %vm1470 = vcmp.lt.s32.totalorder %v1468, %v1469
        %v1471 = vsel %vm1470, %v1468, %v1469
        %v1472 = vrot.slane %v1471, 1
        %vm1473 = vcmp.lt.s32.totalorder %v1471, %v1472
        %v1474 = vsel %vm1473, %v1471, %v1472
        %vm1475 = vcmp.eq.s32.totalorder %v1427, %v1474
        %v1476 = vsel %vm1475, 1, 0
        %v1477 = vcvt.s32.f32 %v1476
        %1478 = vset.pattern.permute.xlu0 0
        %1479 = vperm.xlu0 %1478, %v1042
        %v1480 = vpop.permute.xlu0 %1479
        %v1481 = vsel %vm1475, %v1480, 0
        %v1482 = vrot.slane %v1481, 4
        %v1483 = vadd.s32 %v1481, %v1482
        %v1484 = vrot.slane %v1483, 2
        %v1485 = vadd.s32 %v1483, %v1484
        %v1486 = vrot.slane %v1485, 1
        %v1487 = vadd.s32 %v1485, %v1486
        %1488 = vst [vmem:[%s408] sm:$0x1] %v1487
        %v1489 = vmul.f32 %v1477, %v1055
        %v1490 = vrot.slane %v1489, 4
        %v1491 = vadd.f32 %v1489, %v1490
        %v1492 = vrot.slane %v1491, 2
        %v1493 = vadd.f32 %v1491, %v1492
        %v1494 = vrot.slane %v1493, 1
        %v1495 = vadd.f32 %v1493, %v1494
        %v1496 = vmul.f32 %v1477, %v1075
        %v1497 = vrot.slane %v1496, 4
        %v1498 = vadd.f32 %v1496, %v1497
        %v1499 = vrot.slane %v1498, 2
        %v1500 = vadd.f32 %v1498, %v1499
        %v1501 = vrot.slane %v1500, 1
        %v1502 = vadd.f32 %v1500, %v1501
        %v1503 = vmul.f32 %v1477, %v1046
        %v1504 = vrot.slane %v1503, 4
        %v1505 = vadd.f32 %v1503, %v1504
        %v1506 = vrot.slane %v1505, 2
        %v1507 = vadd.f32 %v1505, %v1506
        %v1508 = vrot.slane %v1507, 1
        %v1509 = vadd.f32 %v1507, %v1508
        %v1510 = vmul.f32 %v1477, %v1066
        %v1511 = vrot.slane %v1510, 4
        %v1512 = vadd.f32 %v1510, %v1511
        %v1513 = vrot.slane %v1512, 2
        %v1514 = vadd.f32 %v1512, %v1513
        %v1515 = vrot.slane %v1514, 1
        %v1516 = vadd.f32 %v1514, %v1515
        %vm1517 = vcmask 1040384
        %v1518 = vsel %vm1517, %v1495, %v1502
        %vm1519 = vcmask 1041408
        %v1520 = vsel %vm1519, %v1518, %v1509
        %vm1521 = vcmask 1042432
        %v1522 = vsel %vm1521, %v1520, %v1516
        %1523 = vst [vmem:[%s415] sm:$0xf] %v1522
        %v1524 = vmul.f32 %v1121, %v1451
        %1525 = vmax.xlane.f32.xlu0 %v1524
        %v1526 = vpop.xlane.xlu0 %1525
        %v1527 = vmul.f32 %v1117, %v1451
        %1528 = vmax.xlane.f32.xlu0 %v1527
        %v1529 = vpop.xlane.xlu0 %1528
        %v1530 = vadd.f32 %v1526, 1e-09
        %v1531 = vrcp.pop %v1530
        %v1532 = vmul.f32 %v1529, %v1531
        %v1533 = vmul.f32 %v1524, %v1532
        %v1534 = vrot.slane %v1533, 4
        %v1535 = vmax.f32 %v1533, %v1534
        %v1536 = vrot.slane %v1535, 2
        %v1537 = vmax.f32 %v1535, %v1536
        %v1538 = vrot.slane %v1537, 1
        %v1539 = vmax.f32 %v1537, %v1538
        %vm1540 = vcmp.gt.f32.partialorder %v1457, 0.0
        %v1541 = vsel %vm1540, %v1539, 0.0
        %1542 = vst [vmem:[%s421] sm:$0x1] %v1541
        %1543 = vst [vmem:[%s427] sm:$0x1] %v1457
        %s1544 = sand.u32 %s192, 1
        %s1545 = scalar_lea.sflag [#allocation4], %s1544
        %s1546 = sand.u32 %s192, 1
        %s1547 = scalar_lea.vmem [#allocation5], %s1546
        %s1548 = sand.u32 %s33, 1
        %s1549 = scalar_lea.sflag [#allocation7], %s1548
        %s1550 = sand.u32 %s218, 1
        %s1551 = smul.addr %s1550, 4
        %s1552 = scalar_lea.vmem [#allocation6], %s1551
        %s1553 = sand.u32 %s33, 1
        %s1554 = scalar_lea.sflag [#allocation7], %s1553
        %s1555 = sand.u32 %s244, 1
        %s1556 = scalar_lea.vmem [#allocation8], %s1555
        %s1557 = sand.u32 %s270, 1
        %s1558 = scalar_lea.sflag [#allocation10], %s1557
        %s1559 = sand.u32 %s270, 1
        %s1560 = scalar_lea.vmem [#allocation9], %s1559
        // Predicated region
        $region49: #{tpu_custom_call.1} parent=43 // pred_check
          %p1561 = pneg %p202
        $region50: #{tpu_custom_call.1} parent=43 // pred_check_branch
          %1563 = sbr.rel (%p1561) target = $region52
        $region51: #{tpu_custom_call.1} parent=43 // pred_region
          %s1565 = ssub.s32 16, 16
          %1566 = vsyncadd %s1545, %s1565
          %s1567 = smul.addr %s33, 16
          %s1568 = scalar_lea.hbm %s6, %s1567
          %s1570 = sshll.u32 %s1547, 4
          %s1571 = int_to_ptr.vmem [resolvable:$true] %s1570
          %1573 = dma.vmem_to_hbm [thread:$0]  %s1571, 16, %s1568, %s1545
        $region52: #{tpu_custom_call.1} parent=43 // pred_fallthru
          _
        // Predicated region
        $region53: #{tpu_custom_call.1} parent=43 // pred_check
          %p1574 = pneg %p228
        $region54: #{tpu_custom_call.1} parent=43 // pred_check_branch
          %1576 = sbr.rel (%p1574) target = $region56
        $region55: #{tpu_custom_call.1} parent=43 // pred_region
          %s1578 = ssub.s32 64, 64
          %1579 = vsyncadd %s1549, %s1578
          %s1580 = smul.addr %s33, 64
          %s1581 = scalar_lea.hbm %s7, %s1580
          %s1583 = sshll.u32 %s1552, 4
          %s1584 = int_to_ptr.vmem [resolvable:$true] %s1583
          %1586 = dma.vmem_to_hbm [thread:$0]  %s1584, 64, %s1581, %s1549
        $region56: #{tpu_custom_call.1} parent=43 // pred_fallthru
          _
        // Predicated region
        $region57: #{tpu_custom_call.1} parent=43 // pred_check
          %p1587 = pneg %p254
        $region58: #{tpu_custom_call.1} parent=43 // pred_check_branch
          %1589 = sbr.rel (%p1587) target = $region60
        $region59: #{tpu_custom_call.1} parent=43 // pred_region
          %s1591 = ssub.s32 16, 16
          %1592 = vsyncadd %s1554, %s1591
          %s1593 = smul.addr %s33, 16
          %s1594 = scalar_lea.hbm %s8, %s1593
          %s1596 = sshll.u32 %s1556, 4
          %s1597 = int_to_ptr.vmem [resolvable:$true] %s1596
          %1599 = dma.vmem_to_hbm [thread:$0]  %s1597, 16, %s1594, %s1554
        $region60: #{tpu_custom_call.1} parent=43 // pred_fallthru
          _
        // Predicated region
        $region61: #{tpu_custom_call.1} parent=43 // pred_check
          %p1600 = pneg %p280
        $region62: #{tpu_custom_call.1} parent=43 // pred_check_branch
          %1602 = sbr.rel (%p1600) target = $region64
        $region63: #{tpu_custom_call.1} parent=43 // pred_region
          %s1604 = ssub.s32 16, 16
          %1605 = vsyncadd %s1558, %s1604
          %s1606 = smul.addr %s33, 16
          %s1607 = scalar_lea.hbm %s9, %s1606
          %s1609 = sshll.u32 %s1560, 4
          %s1610 = int_to_ptr.vmem [resolvable:$true] %s1609
          %1612 = dma.vmem_to_hbm [thread:$0]  %s1610, 16, %s1607, %s1558
        $region64: #{tpu_custom_call.1} parent=43 // pred_fallthru
          _
      $region44: #{tpu_custom_call.1} parent=5 // pred_fallthru
        _
      %p1613 = scmp.le.s32.totalorder 2, %s28
      // Predicated region
      $region65: #{tpu_custom_call.1} parent=5 // pred_check
        %p1614 = pneg %p1613
      $region66: #{tpu_custom_call.1} parent=5 // pred_check_branch
        %1616 = sbr.rel (%p1614) target = $region68
      $region67: #{tpu_custom_call.1} parent=5 // pred_region
        %s1617 = ssub.s32 %s28, 2
        // Predicated region
        $region69: #{tpu_custom_call.1} parent=67 // pred_check
          %p1618 = pneg %p208
        $region70: #{tpu_custom_call.1} parent=67 // pred_check_branch
          %1620 = sbr.rel (%p1618) target = $region72
        $region71: #{tpu_custom_call.1} parent=67 // pred_region
          %s1621 = sand.u32 %s193, 1
          %s1622 = scalar_lea.sflag [#allocation4], %s1621
          %s1623 = sand.u32 %s193, 1
          %s1624 = scalar_lea.vmem [#allocation5], %s1623
          %1625 = dma.done %s1622, 16
        $region72: #{tpu_custom_call.1} parent=67 // pred_fallthru
          _
        // Predicated region
        $region73: #{tpu_custom_call.1} parent=67 // pred_check
          %p1626 = pneg %p234
        $region74: #{tpu_custom_call.1} parent=67 // pred_check_branch
          %1628 = sbr.rel (%p1626) target = $region76
        $region75: #{tpu_custom_call.1} parent=67 // pred_region
          %s1629 = sand.u32 %s34, 1
          %s1630 = scalar_lea.sflag [#allocation7], %s1629
          %s1631 = sand.u32 %s219, 1
          %s1632 = smul.addr %s1631, 4
          %s1633 = scalar_lea.vmem [#allocation6], %s1632
          %1634 = dma.done %s1630, 64
        $region76: #{tpu_custom_call.1} parent=67 // pred_fallthru
          _
        // Predicated region
        $region77: #{tpu_custom_call.1} parent=67 // pred_check
          %p1635 = pneg %p260
        $region78: #{tpu_custom_call.1} parent=67 // pred_check_branch
          %1637 = sbr.rel (%p1635) target = $region80
        $region79: #{tpu_custom_call.1} parent=67 // pred_region
          %s1638 = sand.u32 %s34, 1
          %s1639 = scalar_lea.sflag [#allocation7], %s1638
          %s1640 = sand.u32 %s245, 1
          %s1641 = scalar_lea.vmem [#allocation8], %s1640
          %1642 = dma.done %s1639, 16
        $region80: #{tpu_custom_call.1} parent=67 // pred_fallthru
          _
        // Predicated region
        $region81: #{tpu_custom_call.1} parent=67 // pred_check
          %p1643 = pneg %p286
        $region82: #{tpu_custom_call.1} parent=67 // pred_check_branch
          %1645 = sbr.rel (%p1643) target = $region84
        $region83: #{tpu_custom_call.1} parent=67 // pred_region
          %s1646 = sand.u32 %s271, 1
          %s1647 = scalar_lea.sflag [#allocation10], %s1646
          %s1648 = sand.u32 %s271, 1
          %s1649 = scalar_lea.vmem [#allocation9], %s1648
          %1650 = dma.done %s1647, 16
        $region84: #{tpu_custom_call.1} parent=67 // pred_fallthru
          _
      $region68: #{tpu_custom_call.1} parent=5 // pred_fallthru
        _
    $region6: #{tpu_custom_call.1} parent=1 // loop_footer
      %s32 = sadd.s32 1, %s28
    $region7: #{tpu_custom_call.1} parent=1 // loop_footer_branch
      %27 = sbr.rel target = $region3
    $region8: #{tpu_custom_call.1} parent=1 // loop_exit
      _
    %1651 = vsyncpa [#allocation3], 1
    %s1652 = scalar_lea.sflag [#allocation3], 1
    %1653 = vsyncpa %s1652, 1
    %1654 = vsyncpa [#allocation4], 1
    %s1655 = scalar_lea.sflag [#allocation4], 1
    %1656 = vsyncpa %s1655, 1
    %1657 = vsyncpa [#allocation7], 1
    %s1658 = scalar_lea.sflag [#allocation7], 1
    %1659 = vsyncpa %s1658, 1
    %1660 = vsyncpa [#allocation10], 1
    %s1661 = scalar_lea.sflag [#allocation10], 1
    %1662 = vsyncpa %s1661, 1

</llo_original>
